<compile_context>
chip_gen: v7x
topology: tpu7x:2x2x1
jax: 0.10.0
libtpu: 0.0.40
codegen_flags: <defaults>
</compile_context>

<pallas_src>
import jax
import jax.numpy as jnp
from jax.experimental import pallas as pl
from jax.experimental.pallas import tpu as pltpu


def _round_up(n, m=128):
    return ((n + m - 1) // m) * m


def _pick_point_tile(n, cap=2048):
    """Largest multiple-of-8 divisor of n that is <= cap (else n itself)."""
    best = None
    t = 8
    lim = min(n, cap)
    while t <= lim:
        if n % t == 0:
            best = t
        t += 8
    return best if best is not None else n


# ---------------------------------------------------------------------------
# Host-side parameter folding: BN -> conv, (R, A) -> first conv, pad to 128.
# First-layer weights stay f32 (VPU path); remaining weights are bf16 (MXU),
# all biases f32.
# ---------------------------------------------------------------------------
def fold_params(raw_params, lat_size, R=None, A=None, *, batch, eps=1e-5):
    """raw_params: [(W(cout,cin), b, gamma, beta, run_mean, run_var)] * n_hidden
                   + [(W(lat,cin), b)]   (PyTorch-shaped).
    Returns (w0, b0, rest, lat_padded) where
      w0:   (B, 3, C1p)  f32    per-batch fused  (R @ A[:,:,:3]) @ W1'   weight
      b0:   (B, 1, C1p)  f32    per-batch fused  A[:,:,3] @ W1' + b1'    bias
      rest: [(W (Cin_p, Cout_p) bf16, b (1, Cout_p) f32), ...]  remaining layers
    """
    assert len(raw_params) >= 2, "need at least one hidden conv block"

    # 1) fold eval-mode BN into each hidden conv:  y*scale + (beta - mean*scale)
    layers = []
    for (w, b, gamma, beta, mean, var) in raw_params[:-1]:
        scale = gamma / jnp.sqrt(var + eps)                     # (cout,)
        wf = (w * scale[:, None]).T                             # (cin, cout)
        bf = b * scale + beta - mean * scale                    # (cout,)
        layers.append((wf, bf))
    w, b = raw_params[-1]
    layers.append((w.T, b))                                     # final conv

    # 2) fold the per-batch affine (R, A) into the first conv layer.
    w1, b1 = layers[0]                                          # (3, c1), (c1,)
    c1 = w1.shape[1]
    if R is None and A is None:
        w_eff = jnp.broadcast_to(w1[None], (batch, 3, c1))
        b_eff = jnp.broadcast_to(b1[None], (batch, c1))
    else:
        if R is not None and A is not None:
            m = jnp.einsum('bij,bjk->bik', R, A[:, :, :3])      # (B,3,3)
            t = A[:, :, 3]                                      # (B,3)
        elif R is not None:
            m = R
            t = jnp.zeros((batch, 3), w1.dtype)
        else:
            m = A[:, :, :3]
            t = A[:, :, 3]
        w_eff = jnp.einsum('bij,jk->bik', m, w1)                # (B,3,c1)
        b_eff = jnp.einsum('bj,jk->bk', t, w1) + b1[None, :]    # (B,c1)

    # 3) zero-pad channel dims to multiples of 128.
    c1p = _round_up(c1)
    w0 = jnp.zeros((batch, 3, c1p), jnp.float32).at[:, :, :c1].set(w_eff)
    b0 = jnp.zeros((batch, 1, c1p), jnp.float32).at[:, 0, :c1].set(b_eff)

    rest = []
    cin_p = c1p
    for (wl, bl) in layers[1:]:
        cin, cout = wl.shape
        cout_p = _round_up(cout)
        wp = (jnp.zeros((cin_p, cout_p), jnp.float32)
              .at[:cin, :cout].set(wl).astype(jnp.bfloat16))
        bp = jnp.zeros((1, cout_p), jnp.float32).at[0, :cout].set(bl)
        rest.append((wp, bp))
        cin_p = cout_p

    return w0, b0, rest, _round_up(lat_size)


# ---------------------------------------------------------------------------
# Pallas kernel
# ---------------------------------------------------------------------------
def make_pointnet_kernel(n_rest_layers):
    """Kernel body.  Refs (in order): x, w0, b0, (W_l, b_l)*n_rest, out."""

    def kernel(x_ref, w0_ref, b0_ref, *rest_and_out):
        out_ref = rest_and_out[-1]                       # (1, 1, LATP)
        layer_refs = rest_and_out[:-1]                   # 2 * n_rest_layers refs

        # fused (R, A, conv1, BN1) layer on the VPU: three broadcast FMAs.
        xf = x_ref[0].astype(jnp.float32)                # (tn, 3)
        w0 = w0_ref[0]                                   # (3, C1p)  f32
        h = (xf[:, 0:1] * w0[0:1, :]
             + xf[:, 1:2] * w0[1:2, :]
             + xf[:, 2:3] * w0[2:3, :]
             + b0_ref[0])                                # (tn, C1p) f32
        h = jnp.maximum(h, 0.0).astype(jnp.bfloat16)     # only bf16 stays live

        # remaining hidden blocks (MXU dot + bias + ReLU, bf16 between layers),
        # then the final conv (no ReLU, f32 accumulator kept for the max).
        h_last = None
        for l in range(n_rest_layers):
            w = layer_refs[2 * l][...]                   # (Cin_p, Cout_p) bf16
            b = layer_refs[2 * l + 1][...]               # (1, Cout_p)     f32
            acc = jnp.dot(h, w, preferred_element_type=jnp.float32) + b
            if l < n_rest_layers - 1:
                h = jnp.maximum(acc, 0.0).astype(jnp.bfloat16)
            else:
                h_last = acc                             # (tn, LATP) f32

        # partial max over this point tile; global max is done by the wrapper.
        out_ref[...] = jnp.max(h_last, axis=0, keepdims=True)[None]

    return kernel


def pointnet_forward(x, raw_params, R=None, A=None, *, lat_size, tn=None,
                     vmem_cap_bytes=48 << 20):
    """x: (B, N, 3) f32.  R: (B,3,3) or None.  A: (B,3,4) or None.
    Returns (B, lat_size) f32, matching the PyTorch module (eval-mode BN)."""
    B, N, c0 = x.shape
    assert c0 == 3, "Wrong input dimension"
    if tn is None:
        tn = _pick_point_tile(N)
    assert N % tn == 0 and (tn % 8 == 0 or tn == N)
    nt = N // tn

    w0, b0, rest, latp = fold_params(raw_params, lat_size, R, A, batch=B)
    n_rest = len(rest)
    assert n_rest >= 1
    c1p = w0.shape[2]
    cmax = max([c1p] + [w.shape[1] for w, _ in rest])

    x_bf = x.astype(jnp.bfloat16)            # halve the streaming input's DMA
    args = [x_bf, w0, b0]
    for (wl, bl) in rest:
        args += [wl, bl]

    # Advisory cost estimate (MXU layers + VPU first layer).
    flops = 2 * B * N * (3 * c1p + sum(w.shape[0] * w.shape[1] for w, _ in rest))
    bytes_accessed = (B * N * 3 * 2 + w0.size * 4 + b0.size * 4
                      + sum(w.size * 2 + b.size * 4 for w, b in rest)
                      + B * nt * latp * 4)
    cost = pl.CostEstimate(flops=int(flops), transcendentals=0,
                           bytes_accessed=int(bytes_accessed))

    # Rough VMEM footprint; only raise the scoped limit when actually needed.
    weight_bytes = sum(w.shape[0] * w.shape[1] * 2 + 8 * b.shape[1] * 4
                       for w, b in rest)
    est = (2 * tn * 128 * 2                    # x tile (lane-padded), 2 buffers
           + 2 * (8 * c1p * 4 + 8 * c1p * 4)   # w0 + b0
           + 2 * weight_bytes                  # rest weights (worst case 2 bufs)
           + 2 * 8 * latp * 4                  # out tile
           + 3 * tn * cmax * 4                 # live activations (f32 + bf16)
           + (2 << 20))                        # headroom
    vmem_limit = None
    if est > (12 << 20):
        vmem_limit = min(max(int(est * 1.5), 32 << 20), vmem_cap_bytes)

    def build(single_buffer_weights):
        in_specs = [
            pl.BlockSpec((1, tn, 3), lambda b, t: (b, t, 0)),
            pl.BlockSpec((1, 3, c1p), lambda b, t: (b, 0, 0)),
            pl.BlockSpec((1, 1, c1p), lambda b, t: (b, 0, 0)),
        ]
        for (wl, bl) in rest:
            if single_buffer_weights:
                in_specs += [
                    pl.BlockSpec(wl.shape, lambda b, t: (0, 0),
                                 pipeline_mode=pl.Buffered(1)),
                    pl.BlockSpec(bl.shape, lambda b, t: (0, 0),
                                 pipeline_mode=pl.Buffered(1)),
                ]
            else:
                in_specs += [pl.BlockSpec(wl.shape, lambda b, t: (0, 0)),
                             pl.BlockSpec(bl.shape, lambda b, t: (0, 0))]
        return pl.pallas_call(
            make_pointnet_kernel(n_rest),
            out_shape=jax.ShapeDtypeStruct((B * nt, 1, latp), jnp.float32),
            grid_spec=pltpu.PrefetchScalarGridSpec(
                num_scalar_prefetch=0,
                grid=(B, nt),
                in_specs=in_specs,
                out_specs=pl.BlockSpec((1, 1, latp),
                                       lambda b, t: (b * nt + t, 0, 0)),
            ),
            compiler_params=pltpu.CompilerParams(
                dimension_semantics=("parallel", "parallel"),
                vmem_limit_bytes=vmem_limit),
            cost_estimate=cost,
        )

    try:
        # Grid-invariant weights single-buffered (saves VMEM, esp. on v7x).
        out = jax.block_until_ready(build(True)(*args))
    except Exception:
        # Fallback if this jax build rejects pl.Buffered(1) on BlockSpec.
        out = jax.block_until_ready(build(False)(*args))

    out = out.reshape(B, nt, latp)
    return jnp.max(out, axis=1)[:, :lat_size]    # tiny reduction over NT tiles


# ---------------------------------------------------------------------------
# Parameters + references
# ---------------------------------------------------------------------------
def init_params(key, conv_size, lat_size):
    """Deterministic synthetic parameters mirroring the PyTorch module shapes."""
    params = []
    for i in range(len(conv_size) - 1):
        cin, cout = conv_size[i], conv_size[i + 1]
        key, k1, k2, k3, k4, k5, k6 = jax.random.split(key, 7)
        w = jax.random.normal(k1, (cout, cin), jnp.float32) / jnp.sqrt(float(cin))
        b = 0.05 * jax.random.normal(k2, (cout,), jnp.float32)
        gamma = 1.0 + 0.1 * jax.random.normal(k3, (cout,), jnp.float32)
        beta = 0.05 * jax.random.normal(k4, (cout,), jnp.float32)
        mean = 0.1 * jax.random.normal(k5, (cout,), jnp.float32)
        var = 0.5 + jax.random.uniform(k6, (cout,), jnp.float32)
        params.append((w, b, gamma, beta, mean, var))
    key, k1, k2 = jax.random.split(key, 3)
    cin = conv_size[-1]
    w = jax.random.normal(k1, (lat_size, cin), jnp.float32) / jnp.sqrt(float(cin))
    b = 0.05 * jax.random.normal(k2, (lat_size,), jnp.float32)
    params.append((w, b))
    return params


def pointnet_ref_f32(x, raw_params, R=None, A=None, eps=1e-5):
    """Plain-JAX f32 reference mirroring the PyTorch forward (eval-mode BN)."""
    h = x
    if R is not None:
        h = jnp.einsum('bnc,bcd->bnd', h, R)
    if A is not None:
        h = jnp.einsum('bnc,bcd->bnd', h, A[:, :, :3]) + A[:, :, 3][:, None, :]
    for (w, b, gamma, beta, mean, var) in raw_params[:-1]:
        h = h @ w.T + b
        h = (h - mean) / jnp.sqrt(var + eps) * gamma + beta
        h = jnp.maximum(h, 0.0)
    w, b = raw_params[-1]
    h = h @ w.T + b
    return jnp.max(h, axis=1)


def pointnet_ref_folded(x, w0, b0, rest, lat_size):
    """Reference mirroring the kernel's folded/bf16 numerics exactly."""
    xf = x.astype(jnp.bfloat16).astype(jnp.float32)          # host bf16 cast
    h = jnp.einsum('bnc,bck->bnk', xf, w0) + b0               # f32 VPU path
    h = jnp.maximum(h, 0.0).astype(jnp.bfloat16)
    acc = None
    for i, (w, b) in enumerate(rest):
        acc = jnp.einsum('bnc,ck->bnk', h, w,
                         preferred_element_type=jnp.float32) + b
        if i < len(rest) - 1:
            h = jnp.maximum(acc, 0.0).astype(jnp.bfloat16)
    return jnp.max(acc, axis=1)[:, :lat_size]


if __name__ == "__main__":
    # PointNet(lat_size=64, conv_size=[3, 32, 64]); batch=2, 256 points.
    # tn=128 (< N) deliberately exercises the multi-tile partial-max path.
    conv_size = [3, 32, 64]
    lat_size = 64
    B, N, tn = 2, 256, 128

    key = jax.random.PRNGKey(0)
    key, kx, kr, ka = jax.random.split(key, 4)
    x = jax.random.normal(kx, (B, N, 3), jnp.float32)
    R = jax.random.normal(kr, (B, 3, 3), jnp.float32)
    A = jax.random.normal(ka, (B, 3, 4), jnp.float32)
    params = init_params(key, conv_size, lat_size)

    out = jax.block_until_ready(
        pointnet_forward(x, params, R=R, A=A, lat_size=lat_size, tn=tn))
    assert out.shape == (B, lat_size)

    # 1) tight check vs a reference with identical folded/bf16 numerics.
    w0, b0, rest, _ = fold_params(params, lat_size, R, A, batch=B)
    ref_matched = jax.block_until_ready(
        pointnet_ref_folded(x, w0, b0, rest, lat_size))
    assert jnp.allclose(out, ref_matched, atol=2e-2, rtol=1e-2), (
        f"max abs err vs matched ref {jnp.max(jnp.abs(out - ref_matched))}")

    # 2) loose sanity check vs the full-f32 PyTorch-semantics reference
    #    (difference is only bf16 rounding of x / weights / activations).
    ref_f32 = jax.block_until_ready(pointnet_ref_f32(x, params, R=R, A=A))
    assert jnp.allclose(out, ref_f32, atol=0.6, rtol=0.12), (
        f"max abs err vs f32 ref {jnp.max(jnp.abs(out - ref_f32))}")

    print("KERNEL_OK")
</pallas_src>

<mosaic_0001>
module attributes {stable_mosaic.version = 11 : i64} {
  func.func @kernel(%arg0: i32, %arg1: i32, %arg2: memref<1x128x3xbf16, #tpu.memory_space<vmem>>, %arg3: memref<1x3x128xf32, #tpu.memory_space<vmem>>, %arg4: memref<1x1x128xf32, #tpu.memory_space<vmem>>, %arg5: memref<128x128xbf16, #tpu.memory_space<vmem>>, %arg6: memref<1x128xf32, #tpu.memory_space<vmem>>, %arg7: memref<128x128xbf16, #tpu.memory_space<vmem>>, %arg8: memref<1x128xf32, #tpu.memory_space<vmem>>, %arg9: memref<1x1x128xf32, #tpu.memory_space<vmem>>) attributes {dimension_semantics = [#tpu.dimension_semantics<parallel>, #tpu.dimension_semantics<parallel>], iteration_bounds = array<i64: 2, 2>, scalar_prefetch = 0 : i64, scratch_operands = 0 : i64, tpu.core_type = #tpu.core_type<tc>, window_params = [{transform_indices = @transform_0, window_bounds = array<i64: 1, 128, 3>}, {transform_indices = @transform_1, window_bounds = array<i64: 1, 3, 128>}, {transform_indices = @transform_2, window_bounds = array<i64: 1, 1, 128>}, {pipeline_mode = #tpu.pipeline_mode<synchronous>, transform_indices = @transform_3, window_bounds = array<i64: 128, 128>}, {pipeline_mode = #tpu.pipeline_mode<synchronous>, transform_indices = @transform_4, window_bounds = array<i64: 1, 128>}, {pipeline_mode = #tpu.pipeline_mode<synchronous>, transform_indices = @transform_5, window_bounds = array<i64: 128, 128>}, {pipeline_mode = #tpu.pipeline_mode<synchronous>, transform_indices = @transform_6, window_bounds = array<i64: 1, 128>}, {transform_indices = @transform_7, window_bounds = array<i64: 1, 1, 128>}]} {
    %c0 = arith.constant 0 : index
    %c0_0 = arith.constant 0 : index
    %c0_1 = arith.constant 0 : index
    %0 = vector.load %arg2[%c0, %c0_0, %c0_1] : memref<1x128x3xbf16, #tpu.memory_space<vmem>>, vector<1x128x3xbf16>
    %1 = vector.shape_cast %0 : vector<1x128x3xbf16> to vector<128x3xbf16>
    %2 = arith.extf %1 : vector<128x3xbf16> to vector<128x3xf32>
    %c0_2 = arith.constant 0 : index
    %c0_3 = arith.constant 0 : index
    %c0_4 = arith.constant 0 : index
    %3 = vector.load %arg3[%c0_2, %c0_3, %c0_4] : memref<1x3x128xf32, #tpu.memory_space<vmem>>, vector<1x3x128xf32>
    %4 = vector.shape_cast %3 : vector<1x3x128xf32> to vector<3x128xf32>
    %5 = vector.extract_strided_slice %2 {offsets = [0, 0], sizes = [128, 1], strides = [1, 1]} : vector<128x3xf32> to vector<128x1xf32>
    %6 = vector.extract_strided_slice %4 {offsets = [0, 0], sizes = [1, 128], strides = [1, 1]} : vector<3x128xf32> to vector<1x128xf32>
    %7 = vector.broadcast %5 : vector<128x1xf32> to vector<128x128xf32>
    %8 = vector.broadcast %6 : vector<1x128xf32> to vector<128x128xf32>
    %9 = arith.mulf %7, %8 : vector<128x128xf32>
    %10 = vector.extract_strided_slice %2 {offsets = [0, 1], sizes = [128, 1], strides = [1, 1]} : vector<128x3xf32> to vector<128x1xf32>
    %11 = vector.extract_strided_slice %4 {offsets = [1, 0], sizes = [1, 128], strides = [1, 1]} : vector<3x128xf32> to vector<1x128xf32>
    %12 = vector.broadcast %10 : vector<128x1xf32> to vector<128x128xf32>
    %13 = vector.broadcast %11 : vector<1x128xf32> to vector<128x128xf32>
    %14 = arith.mulf %12, %13 : vector<128x128xf32>
    %15 = arith.addf %9, %14 : vector<128x128xf32>
    %16 = vector.extract_strided_slice %2 {offsets = [0, 2], sizes = [128, 1], strides = [1, 1]} : vector<128x3xf32> to vector<128x1xf32>
    %17 = vector.extract_strided_slice %4 {offsets = [2, 0], sizes = [1, 128], strides = [1, 1]} : vector<3x128xf32> to vector<1x128xf32>
    %18 = vector.broadcast %16 : vector<128x1xf32> to vector<128x128xf32>
    %19 = vector.broadcast %17 : vector<1x128xf32> to vector<128x128xf32>
    %20 = arith.mulf %18, %19 : vector<128x128xf32>
    %21 = arith.addf %15, %20 : vector<128x128xf32>
    %c0_5 = arith.constant 0 : index
    %c0_6 = arith.constant 0 : index
    %c0_7 = arith.constant 0 : index
    %22 = vector.load %arg4[%c0_5, %c0_6, %c0_7] : memref<1x1x128xf32, #tpu.memory_space<vmem>>, vector<1x1x128xf32>
    %23 = vector.shape_cast %22 : vector<1x1x128xf32> to vector<1x128xf32>
    %24 = vector.broadcast %23 : vector<1x128xf32> to vector<128x128xf32>
    %25 = arith.addf %21, %24 : vector<128x128xf32>
    %cst = arith.constant 0.000000e+00 : f32
    %26 = vector.broadcast %cst : f32 to vector<128x128xf32>
    %27 = arith.maximumf %25, %26 : vector<128x128xf32>
    %28 = arith.truncf %27 : vector<128x128xf32> to vector<128x128xbf16>
    %c0_8 = arith.constant 0 : index
    %c0_9 = arith.constant 0 : index
    %29 = vector.load %arg5[%c0_8, %c0_9] : memref<128x128xbf16, #tpu.memory_space<vmem>>, vector<128x128xbf16>
    %c0_10 = arith.constant 0 : index
    %c0_11 = arith.constant 0 : index
    %30 = vector.load %arg6[%c0_10, %c0_11] : memref<1x128xf32, #tpu.memory_space<vmem>>, vector<1x128xf32>
    %cst_12 = arith.constant dense<0.000000e+00> : vector<128x128xf32>
    %31 = tpu.matmul %28, %29, %cst_12 {dimension_numbers = #tpu.dot_dimension_numbers<[1], [0], [0], [1], [0, 0, 1, 1], [], []>} : vector<128x128xbf16>, vector<128x128xbf16>, vector<128x128xf32> -> vector<128x128xf32>
    %32 = vector.broadcast %30 : vector<1x128xf32> to vector<128x128xf32>
    %33 = arith.addf %31, %32 : vector<128x128xf32>
    %cst_13 = arith.constant 0.000000e+00 : f32
    %34 = vector.broadcast %cst_13 : f32 to vector<128x128xf32>
    %35 = arith.maximumf %33, %34 : vector<128x128xf32>
    %36 = arith.truncf %35 : vector<128x128xf32> to vector<128x128xbf16>
    %c0_14 = arith.constant 0 : index
    %c0_15 = arith.constant 0 : index
    %37 = vector.load %arg7[%c0_14, %c0_15] : memref<128x128xbf16, #tpu.memory_space<vmem>>, vector<128x128xbf16>
    %c0_16 = arith.constant 0 : index
    %c0_17 = arith.constant 0 : index
    %38 = vector.load %arg8[%c0_16, %c0_17] : memref<1x128xf32, #tpu.memory_space<vmem>>, vector<1x128xf32>
    %cst_18 = arith.constant dense<0.000000e+00> : vector<128x128xf32>
    %39 = tpu.matmul %36, %37, %cst_18 {dimension_numbers = #tpu.dot_dimension_numbers<[1], [0], [0], [1], [0, 0, 1, 1], [], []>} : vector<128x128xbf16>, vector<128x128xbf16>, vector<128x128xf32> -> vector<128x128xf32>
    %40 = vector.broadcast %38 : vector<1x128xf32> to vector<128x128xf32>
    %41 = arith.addf %39, %40 : vector<128x128xf32>
    %cst_19 = arith.constant dense<0xFF800000> : vector<128xf32>
    %42 = vector.multi_reduction <maximumf>, %41, %cst_19 [0] : vector<128x128xf32> to vector<128xf32>
    %43 = vector.shape_cast %42 : vector<128xf32> to vector<1x128xf32>
    %44 = vector.shape_cast %43 : vector<1x128xf32> to vector<1x1x128xf32>
    %c0_20 = arith.constant 0 : index
    %c0_21 = arith.constant 0 : index
    %c0_22 = arith.constant 0 : index
    %45 = vector.load %arg9[%c0_20, %c0_21, %c0_22] : memref<1x1x128xf32, #tpu.memory_space<vmem>>, vector<1x1x128xf32>
    tpu.vector_store %arg9[%c0_20, %c0_21, %c0_22], %44 {strides = array<i32>} : memref<1x1x128xf32, #tpu.memory_space<vmem>>, vector<1x1x128xf32>,
    return
  }
  func.func @transform_0(%arg0: i32, %arg1: i32) -> (i32, i32, i32) {
    %c0_i32 = arith.constant 0 : i32
    %c0_i32_0 = arith.constant 0 : i32
    return %arg0, %arg1, %c0_i32 : i32, i32, i32
  }
  func.func @transform_1(%arg0: i32, %arg1: i32) -> (i32, i32, i32) {
    %c0_i32 = arith.constant 0 : i32
    %c0_i32_0 = arith.constant 0 : i32
    %c0_i32_1 = arith.constant 0 : i32
    return %arg0, %c0_i32, %c0_i32_0 : i32, i32, i32
  }
  func.func @transform_2(%arg0: i32, %arg1: i32) -> (i32, i32, i32) {
    %c0_i32 = arith.constant 0 : i32
    %c0_i32_0 = arith.constant 0 : i32
    %c0_i32_1 = arith.constant 0 : i32
    return %arg0, %c0_i32, %c0_i32_0 : i32, i32, i32
  }
  func.func @transform_3(%arg0: i32, %arg1: i32) -> (i32, i32) {
    %c0_i32 = arith.constant 0 : i32
    %c0_i32_0 = arith.constant 0 : i32
    %c0_i32_1 = arith.constant 0 : i32
    return %c0_i32, %c0_i32_0 : i32, i32
  }
  func.func @transform_4(%arg0: i32, %arg1: i32) -> (i32, i32) {
    %c0_i32 = arith.constant 0 : i32
    %c0_i32_0 = arith.constant 0 : i32
    %c0_i32_1 = arith.constant 0 : i32
    return %c0_i32, %c0_i32_0 : i32, i32
  }
  func.func @transform_5(%arg0: i32, %arg1: i32) -> (i32, i32) {
    %c0_i32 = arith.constant 0 : i32
    %c0_i32_0 = arith.constant 0 : i32
    %c0_i32_1 = arith.constant 0 : i32
    return %c0_i32, %c0_i32_0 : i32, i32
  }
  func.func @transform_6(%arg0: i32, %arg1: i32) -> (i32, i32) {
    %c0_i32 = arith.constant 0 : i32
    %c0_i32_0 = arith.constant 0 : i32
    %c0_i32_1 = arith.constant 0 : i32
    return %c0_i32, %c0_i32_0 : i32, i32
  }
  func.func @transform_7(%arg0: i32, %arg1: i32) -> (i32, i32, i32) {
    %c2_i32 = arith.constant 2 : i32
    %0 = arith.muli %arg0, %c2_i32 : i32
    %1 = arith.addi %0, %arg1 : i32
    %c0_i32 = arith.constant 0 : i32
    %c0_i32_0 = arith.constant 0 : i32
    %c0_i32_1 = arith.constant 0 : i32
    return %1, %c0_i32, %c0_i32_0 : i32, i32, i32
  }
}

module attributes {stable_mosaic.version = 11 : i64} {
  func.func @kernel(%arg0: i32, %arg1: i32, %arg2: memref<1x128x3xbf16, #tpu.memory_space<vmem>>, %arg3: memref<1x3x128xf32, #tpu.memory_space<vmem>>, %arg4: memref<1x1x128xf32, #tpu.memory_space<vmem>>, %arg5: memref<128x128xbf16, #tpu.memory_space<vmem>>, %arg6: memref<1x128xf32, #tpu.memory_space<vmem>>, %arg7: memref<128x128xbf16, #tpu.memory_space<vmem>>, %arg8: memref<1x128xf32, #tpu.memory_space<vmem>>, %arg9: memref<1x1x128xf32, #tpu.memory_space<vmem>>) attributes {dimension_semantics = [#tpu.dimension_semantics<parallel>, #tpu.dimension_semantics<parallel>], iteration_bounds = array<i64: 2, 2>, scalar_prefetch = 0 : i64, scratch_operands = 0 : i64, tpu.core_type = #tpu.core_type<tc>, window_params = [{transform_indices = @transform_0, window_bounds = array<i64: 1, 128, 3>}, {transform_indices = @transform_1, window_bounds = array<i64: 1, 3, 128>}, {transform_indices = @transform_2, window_bounds = array<i64: 1, 1, 128>}, {pipeline_mode = #tpu.pipeline_mode<synchronous>, transform_indices = @transform_3, window_bounds = array<i64: 128, 128>}, {pipeline_mode = #tpu.pipeline_mode<synchronous>, transform_indices = @transform_4, window_bounds = array<i64: 1, 128>}, {pipeline_mode = #tpu.pipeline_mode<synchronous>, transform_indices = @transform_5, window_bounds = array<i64: 128, 128>}, {pipeline_mode = #tpu.pipeline_mode<synchronous>, transform_indices = @transform_6, window_bounds = array<i64: 1, 128>}, {transform_indices = @transform_7, window_bounds = array<i64: 1, 1, 128>}]} {
    %c0 = arith.constant 0 : index
    %c0_0 = arith.constant 0 : index
    %c0_1 = arith.constant 0 : index
    %0 = vector.load %arg2[%c0, %c0_0, %c0_1] : memref<1x128x3xbf16, #tpu.memory_space<vmem>>, vector<1x128x3xbf16>
    %1 = vector.shape_cast %0 : vector<1x128x3xbf16> to vector<128x3xbf16>
    %2 = arith.extf %1 : vector<128x3xbf16> to vector<128x3xf32>
    %c0_2 = arith.constant 0 : index
    %c0_3 = arith.constant 0 : index
    %c0_4 = arith.constant 0 : index
    %3 = vector.load %arg3[%c0_2, %c0_3, %c0_4] : memref<1x3x128xf32, #tpu.memory_space<vmem>>, vector<1x3x128xf32>
    %4 = vector.shape_cast %3 : vector<1x3x128xf32> to vector<3x128xf32>
    %5 = vector.extract_strided_slice %2 {offsets = [0, 0], sizes = [128, 1], strides = [1, 1]} : vector<128x3xf32> to vector<128x1xf32>
    %6 = vector.extract_strided_slice %4 {offsets = [0, 0], sizes = [1, 128], strides = [1, 1]} : vector<3x128xf32> to vector<1x128xf32>
    %7 = vector.broadcast %5 : vector<128x1xf32> to vector<128x128xf32>
    %8 = vector.broadcast %6 : vector<1x128xf32> to vector<128x128xf32>
    %9 = arith.mulf %7, %8 : vector<128x128xf32>
    %10 = vector.extract_strided_slice %2 {offsets = [0, 1], sizes = [128, 1], strides = [1, 1]} : vector<128x3xf32> to vector<128x1xf32>
    %11 = vector.extract_strided_slice %4 {offsets = [1, 0], sizes = [1, 128], strides = [1, 1]} : vector<3x128xf32> to vector<1x128xf32>
    %12 = vector.broadcast %10 : vector<128x1xf32> to vector<128x128xf32>
    %13 = vector.broadcast %11 : vector<1x128xf32> to vector<128x128xf32>
    %14 = arith.mulf %12, %13 : vector<128x128xf32>
    %15 = arith.addf %9, %14 : vector<128x128xf32>
    %16 = vector.extract_strided_slice %2 {offsets = [0, 2], sizes = [128, 1], strides = [1, 1]} : vector<128x3xf32> to vector<128x1xf32>
    %17 = vector.extract_strided_slice %4 {offsets = [2, 0], sizes = [1, 128], strides = [1, 1]} : vector<3x128xf32> to vector<1x128xf32>
    %18 = vector.broadcast %16 : vector<128x1xf32> to vector<128x128xf32>
    %19 = vector.broadcast %17 : vector<1x128xf32> to vector<128x128xf32>
    %20 = arith.mulf %18, %19 : vector<128x128xf32>
    %21 = arith.addf %15, %20 : vector<128x128xf32>
    %c0_5 = arith.constant 0 : index
    %c0_6 = arith.constant 0 : index
    %c0_7 = arith.constant 0 : index
    %22 = vector.load %arg4[%c0_5, %c0_6, %c0_7] : memref<1x1x128xf32, #tpu.memory_space<vmem>>, vector<1x1x128xf32>
    %23 = vector.shape_cast %22 : vector<1x1x128xf32> to vector<1x128xf32>
    %24 = vector.broadcast %23 : vector<1x128xf32> to vector<128x128xf32>
    %25 = arith.addf %21, %24 : vector<128x128xf32>
    %cst = arith.constant 0.000000e+00 : f32
    %26 = vector.broadcast %cst : f32 to vector<128x128xf32>
    %27 = arith.maximumf %25, %26 : vector<128x128xf32>
    %28 = arith.truncf %27 : vector<128x128xf32> to vector<128x128xbf16>
    %c0_8 = arith.constant 0 : index
    %c0_9 = arith.constant 0 : index
    %29 = vector.load %arg5[%c0_8, %c0_9] : memref<128x128xbf16, #tpu.memory_space<vmem>>, vector<128x128xbf16>
    %c0_10 = arith.constant 0 : index
    %c0_11 = arith.constant 0 : index
    %30 = vector.load %arg6[%c0_10, %c0_11] : memref<1x128xf32, #tpu.memory_space<vmem>>, vector<1x128xf32>
    %cst_12 = arith.constant dense<0.000000e+00> : vector<128x128xf32>
    %31 = tpu.matmul %28, %29, %cst_12 {dimension_numbers = #tpu.dot_dimension_numbers<[1], [0], [0], [1], [0, 0, 1, 1], [], []>} : vector<128x128xbf16>, vector<128x128xbf16>, vector<128x128xf32> -> vector<128x128xf32>
    %32 = vector.broadcast %30 : vector<1x128xf32> to vector<128x128xf32>
    %33 = arith.addf %31, %32 : vector<128x128xf32>
    %cst_13 = arith.constant 0.000000e+00 : f32
    %34 = vector.broadcast %cst_13 : f32 to vector<128x128xf32>
    %35 = arith.maximumf %33, %34 : vector<128x128xf32>
    %36 = arith.truncf %35 : vector<128x128xf32> to vector<128x128xbf16>
    %c0_14 = arith.constant 0 : index
    %c0_15 = arith.constant 0 : index
    %37 = vector.load %arg7[%c0_14, %c0_15] : memref<128x128xbf16, #tpu.memory_space<vmem>>, vector<128x128xbf16>
    %c0_16 = arith.constant 0 : index
    %c0_17 = arith.constant 0 : index
    %38 = vector.load %arg8[%c0_16, %c0_17] : memref<1x128xf32, #tpu.memory_space<vmem>>, vector<1x128xf32>
    %cst_18 = arith.constant dense<0.000000e+00> : vector<128x128xf32>
    %39 = tpu.matmul %36, %37, %cst_18 {dimension_numbers = #tpu.dot_dimension_numbers<[1], [0], [0], [1], [0, 0, 1, 1], [], []>} : vector<128x128xbf16>, vector<128x128xbf16>, vector<128x128xf32> -> vector<128x128xf32>
    %40 = vector.broadcast %38 : vector<1x128xf32> to vector<128x128xf32>
    %41 = arith.addf %39, %40 : vector<128x128xf32>
    %cst_19 = arith.constant dense<0xFF800000> : vector<128xf32>
    %42 = vector.multi_reduction <maximumf>, %41, %cst_19 [0] : vector<128x128xf32> to vector<128xf32>
    %43 = vector.shape_cast %42 : vector<128xf32> to vector<1x128xf32>
    %44 = vector.shape_cast %43 : vector<1x128xf32> to vector<1x1x128xf32>
    %c0_20 = arith.constant 0 : index
    %c0_21 = arith.constant 0 : index
    %c0_22 = arith.constant 0 : index
    %45 = vector.load %arg9[%c0_20, %c0_21, %c0_22] : memref<1x1x128xf32, #tpu.memory_space<vmem>>, vector<1x1x128xf32>
    tpu.vector_store %arg9[%c0_20, %c0_21, %c0_22], %44 {strides = array<i32>} : memref<1x1x128xf32, #tpu.memory_space<vmem>>, vector<1x1x128xf32>,
    return
  }
  func.func @transform_0(%arg0: i32, %arg1: i32) -> (i32, i32, i32) {
    %c0_i32 = arith.constant 0 : i32
    %c0_i32_0 = arith.constant 0 : i32
    return %arg0, %arg1, %c0_i32 : i32, i32, i32
  }
  func.func @transform_1(%arg0: i32, %arg1: i32) -> (i32, i32, i32) {
    %c0_i32 = arith.constant 0 : i32
    %c0_i32_0 = arith.constant 0 : i32
    %c0_i32_1 = arith.constant 0 : i32
    return %arg0, %c0_i32, %c0_i32_0 : i32, i32, i32
  }
  func.func @transform_2(%arg0: i32, %arg1: i32) -> (i32, i32, i32) {
    %c0_i32 = arith.constant 0 : i32
    %c0_i32_0 = arith.constant 0 : i32
    %c0_i32_1 = arith.constant 0 : i32
    return %arg0, %c0_i32, %c0_i32_0 : i32, i32, i32
  }
  func.func @transform_3(%arg0: i32, %arg1: i32) -> (i32, i32) {
    %c0_i32 = arith.constant 0 : i32
    %c0_i32_0 = arith.constant 0 : i32
    %c0_i32_1 = arith.constant 0 : i32
    return %c0_i32, %c0_i32_0 : i32, i32
  }
  func.func @transform_4(%arg0: i32, %arg1: i32) -> (i32, i32) {
    %c0_i32 = arith.constant 0 : i32
    %c0_i32_0 = arith.constant 0 : i32
    %c0_i32_1 = arith.constant 0 : i32
    return %c0_i32, %c0_i32_0 : i32, i32
  }
  func.func @transform_5(%arg0: i32, %arg1: i32) -> (i32, i32) {
    %c0_i32 = arith.constant 0 : i32
    %c0_i32_0 = arith.constant 0 : i32
    %c0_i32_1 = arith.constant 0 : i32
    return %c0_i32, %c0_i32_0 : i32, i32
  }
  func.func @transform_6(%arg0: i32, %arg1: i32) -> (i32, i32) {
    %c0_i32 = arith.constant 0 : i32
    %c0_i32_0 = arith.constant 0 : i32
    %c0_i32_1 = arith.constant 0 : i32
    return %c0_i32, %c0_i32_0 : i32, i32
  }
  func.func @transform_7(%arg0: i32, %arg1: i32) -> (i32, i32, i32) {
    %c2_i32 = arith.constant 2 : i32
    %0 = arith.muli %arg0, %c2_i32 : i32
    %1 = arith.addi %0, %arg1 : i32
    %c0_i32 = arith.constant 0 : i32
    %c0_i32_0 = arith.constant 0 : i32
    %c0_i32_1 = arith.constant 0 : i32
    return %1, %c0_i32, %c0_i32_0 : i32, i32, i32
  }
}

</mosaic_0001>

<llo_original>
// kernel: tpu_custom_call.1
$region0: #{tpu_custom_call.1}
  #allocation0 [shape = 'u32[]', space=smem, size = 0x4, offset = 0x4, fixed_abs, tag = 'smem constant byte address 0x4 - core index']
  #allocation1 [shape = 'u32[144,128]{1,0:T(1,128)}', space=vmem, size = 0x12000, scoped, tag = 'internal scratch']
  %s0 = inlined_call_operand.vmem [shape: bf16[2,256,3], index: 0, kind: input, shape index: {}]
  %s1 = inlined_call_operand.vmem [shape: f32[2,3,128], index: 1, kind: input, shape index: {}]
  %s2 = inlined_call_operand.vmem [shape: f32[2,1,128], index: 2, kind: input, shape index: {}]
  %s3 = inlined_call_operand.vmem [shape: bf16[128,128], index: 3, kind: input, shape index: {}]
  %s4 = inlined_call_operand.vmem [shape: f32[1,128], index: 4, kind: input, shape index: {}]
  %s5 = inlined_call_operand.vmem [shape: bf16[128,128], index: 5, kind: input, shape index: {}]
  %s6 = inlined_call_operand.vmem [shape: f32[1,128], index: 6, kind: input, shape index: {}]
  %s7 = inlined_call_operand.hbm [shape: f32[4,1,128], index: 7, kind: output, shape index: {}]
  %s8 = sld [smem:[#allocation0]]
  $region61: #{tpu_custom_call.1} parent=0
    _
  %s10 = ssub.s32 1, %s8
  %s11 = scalar_select 0, %s10, %s8
  $region1: #{tpu_custom_call.1} parent=0
    #allocation2 [shape = 'u8[1024]{0}', space=vmem, size = 0x400, scoped, tag = 'output window, operand 0']
    #allocation3 [shape = 's32[2]{0}', space=sflag, size = 0x8, scoped, tag = 'scoped memory for tpu_custom_call.1']
    %12 = vsyncpa [#allocation3], 0
    %s13 = scalar_lea.sflag [#allocation3], 1
    %14 = vsyncpa %s13, 0
    loop: start=0, step=1, limit=6
    $region2: #{tpu_custom_call.1} parent=1 // loop_pre_header
      _
    $region3: #{tpu_custom_call.1} parent=1 // loop_header
      %s16 = sphi 0, %s20
      %p17 = scmp.ge.s32.totalorder %s16, 6
      %s23 = sphi 0, %s35
      %s24 = sphi 0, %s31
      %s25 = sphi 0, %s23
      %s26 = sphi 0, %s24
      %s27 = sphi 0, %s25
      %s28 = sphi 0, %s26
      %s40 = sphi 0, %s42
      %s43 = sphi 0, %s40
      %s44 = sphi 0, %s43
      %s60 = sphi 0, %s44
      %s66 = sphi 0, %s68
      %s69 = sphi 0, %s66
      %s70 = sphi 0, %s69
      %s86 = sphi 0, %s70
      %s92 = sphi 0, %s94
      %s95 = sphi 0, %s92
      %s96 = sphi 0, %s95
      %s112 = sphi 0, %s96
      %s116 = sphi 0, %s116
      %s118 = sphi 0, %s116
      %s119 = sphi 0, %s118
      %s133 = sphi 0, %s119
      %s137 = sphi 0, %s137
      %s139 = sphi 0, %s137
      %s140 = sphi 0, %s139
      %s154 = sphi 0, %s140
      %s158 = sphi 0, %s158
      %s160 = sphi 0, %s158
      %s161 = sphi 0, %s160
      %s175 = sphi 0, %s161
      %s179 = sphi 0, %s179
      %s181 = sphi 0, %s179
      %s182 = sphi 0, %s181
      %s196 = sphi 0, %s182
      %s206 = sphi 0, %s208
      %s209 = sphi 0, %s206
      %s210 = sphi 0, %s209
      %s226 = sphi 0, %s210
    $region4: #{tpu_custom_call.1} parent=1 // loop_header_branch
      %19 = sbr.rel (%p17) target = $region8
    $region5: #{tpu_custom_call.1} parent=1 // loop_body
      %s21 = ssub.s32 %s16, 1
      %s22 = ssub.s32 %s16, 2
      %s29 = sadd.s32 1, %s24
      %p30 = scmp.ge.s32.totalorder %s29, 2
      %s31 = scalar_select %p30, 0, %s29
      %s32 = sadd.s32 1, %s23
      %s33 = scalar_select %p30, %s32, %s23
      %p34 = scmp.ge.s32.totalorder %s33, 2
      %s35 = scalar_select %p34, 0, %s33
      %s36 = ssub.s32 %s23, %s35
      %s37 = ssub.s32 %s24, %s31
      %s38 = sor.u32 %s36, %s37
      %p39 = scmp.eq.s32.totalorder %s38, 0
      %s41 = sadd.s32 %s40, 1
      %s42 = scalar_select %p39, %s40, %s41
      %p45 = pneg %p39
      %p46 = scmp.eq.s32.totalorder %s16, 3
      %p47 = por %p45, %p46
      %p48 = scmp.ne.s32.totalorder %s40, %s43
      %p49 = scmp.eq.s32.totalorder %s16, 0
      %p50 = por %p48, %p49
      %p51 = scmp.ne.s32.totalorder %s40, %s43
      %p52 = scmp.eq.s32.totalorder %s21, 3
      %p53 = por %p51, %p52
      %p54 = scmp.ne.s32.totalorder %s43, %s44
      %p55 = scmp.eq.s32.totalorder %s21, 0
      %p56 = por %p54, %p55
      %p57 = scmp.ne.s32.totalorder %s43, %s44
      %p58 = scmp.eq.s32.totalorder %s22, 3
      %p59 = por %p57, %p58
      %p61 = scmp.ne.s32.totalorder %s44, %s60
      %p62 = scmp.eq.s32.totalorder %s22, 0
      %p63 = por %p61, %p62
      %s64 = ssub.s32 %s23, %s35
      %p65 = scmp.eq.s32.totalorder %s64, 0
      %s67 = sadd.s32 %s66, 1
      %s68 = scalar_select %p65, %s66, %s67
      %p71 = pneg %p65
      %p72 = scmp.eq.s32.totalorder %s16, 3
      %p73 = por %p71, %p72
      %p74 = scmp.ne.s32.totalorder %s66, %s69
      %p75 = scmp.eq.s32.totalorder %s16, 0
      %p76 = por %p74, %p75
      %p77 = scmp.ne.s32.totalorder %s66, %s69
      %p78 = scmp.eq.s32.totalorder %s21, 3
      %p79 = por %p77, %p78
      %p80 = scmp.ne.s32.totalorder %s69, %s70
      %p81 = scmp.eq.s32.totalorder %s21, 0
      %p82 = por %p80, %p81
      %p83 = scmp.ne.s32.totalorder %s69, %s70
      %p84 = scmp.eq.s32.totalorder %s22, 3
      %p85 = por %p83, %p84
      %p87 = scmp.ne.s32.totalorder %s70, %s86
      %p88 = scmp.eq.s32.totalorder %s22, 0
      %p89 = por %p87, %p88
      %s90 = ssub.s32 %s23, %s35
      %p91 = scmp.eq.s32.totalorder %s90, 0
      %s93 = sadd.s32 %s92, 1
      %s94 = scalar_select %p91, %s92, %s93
      %p97 = pneg %p91
      %p98 = scmp.eq.s32.totalorder %s16, 3
      %p99 = por %p97, %p98
      %p100 = scmp.ne.s32.totalorder %s92, %s95
      %p101 = scmp.eq.s32.totalorder %s16, 0
      %p102 = por %p100, %p101
      %p103 = scmp.ne.s32.totalorder %s92, %s95
      %p104 = scmp.eq.s32.totalorder %s21, 3
      %p105 = por %p103, %p104
      %p106 = scmp.ne.s32.totalorder %s95, %s96
      %p107 = scmp.eq.s32.totalorder %s21, 0
      %p108 = por %p106, %p107
      %p109 = scmp.ne.s32.totalorder %s95, %s96
      %p110 = scmp.eq.s32.totalorder %s22, 3
      %p111 = por %p109, %p110
      %p113 = scmp.ne.s32.totalorder %s96, %s112
      %p114 = scmp.eq.s32.totalorder %s22, 0
      %p115 = por %p113, %p114
      %s117 = sadd.s32 %s116, 1
      %p120 = scmp.eq.s32.totalorder %s16, 3
      %p121 = scmp.ne.s32.totalorder %s116, %s118
      %p122 = scmp.eq.s32.totalorder %s16, 0
      %p123 = por %p121, %p122
      %p124 = scmp.ne.s32.totalorder %s116, %s118
      %p125 = scmp.eq.s32.totalorder %s21, 3
      %p126 = por %p124, %p125
      %p127 = scmp.ne.s32.totalorder %s118, %s119
      %p128 = scmp.eq.s32.totalorder %s21, 0
      %p129 = por %p127, %p128
      %p130 = scmp.ne.s32.totalorder %s118, %s119
      %p131 = scmp.eq.s32.totalorder %s22, 3
      %p132 = por %p130, %p131
      %p134 = scmp.ne.s32.totalorder %s119, %s133
      %p135 = scmp.eq.s32.totalorder %s22, 0
      %p136 = por %p134, %p135
      %s138 = sadd.s32 %s137, 1
      %p141 = scmp.eq.s32.totalorder %s16, 3
      %p142 = scmp.ne.s32.totalorder %s137, %s139
      %p143 = scmp.eq.s32.totalorder %s16, 0
      %p144 = por %p142, %p143
      %p145 = scmp.ne.s32.totalorder %s137, %s139
      %p146 = scmp.eq.s32.totalorder %s21, 3
      %p147 = por %p145, %p146
      %p148 = scmp.ne.s32.totalorder %s139, %s140
      %p149 = scmp.eq.s32.totalorder %s21, 0
      %p150 = por %p148, %p149
      %p151 = scmp.ne.s32.totalorder %s139, %s140
      %p152 = scmp.eq.s32.totalorder %s22, 3
      %p153 = por %p151, %p152
      %p155 = scmp.ne.s32.totalorder %s140, %s154
      %p156 = scmp.eq.s32.totalorder %s22, 0
      %p157 = por %p155, %p156
      %s159 = sadd.s32 %s158, 1
      %p162 = scmp.eq.s32.totalorder %s16, 3
      %p163 = scmp.ne.s32.totalorder %s158, %s160
      %p164 = scmp.eq.s32.totalorder %s16, 0
      %p165 = por %p163, %p164
      %p166 = scmp.ne.s32.totalorder %s158, %s160
      %p167 = scmp.eq.s32.totalorder %s21, 3
      %p168 = por %p166, %p167
      %p169 = scmp.ne.s32.totalorder %s160, %s161
      %p170 = scmp.eq.s32.totalorder %s21, 0
      %p171 = por %p169, %p170
      %p172 = scmp.ne.s32.totalorder %s160, %s161
      %p173 = scmp.eq.s32.totalorder %s22, 3
      %p174 = por %p172, %p173
      %p176 = scmp.ne.s32.totalorder %s161, %s175
      %p177 = scmp.eq.s32.totalorder %s22, 0
      %p178 = por %p176, %p177
      %s180 = sadd.s32 %s179, 1
      %p183 = scmp.eq.s32.totalorder %s16, 3
      %p184 = scmp.ne.s32.totalorder %s179, %s181
      %p185 = scmp.eq.s32.totalorder %s16, 0
      %p186 = por %p184, %p185
      %p187 = scmp.ne.s32.totalorder %s179, %s181
      %p188 = scmp.eq.s32.totalorder %s21, 3
      %p189 = por %p187, %p188
      %p190 = scmp.ne.s32.totalorder %s181, %s182
      %p191 = scmp.eq.s32.totalorder %s21, 0
      %p192 = por %p190, %p191
      %p193 = scmp.ne.s32.totalorder %s181, %s182
      %p194 = scmp.eq.s32.totalorder %s22, 3
      %p195 = por %p193, %p194
      %p197 = scmp.ne.s32.totalorder %s182, %s196
      %p198 = scmp.eq.s32.totalorder %s22, 0
      %p199 = por %p197, %p198
      %s200 = smul.u32 %s23, 2
      %s201 = sadd.s32 %s200, %s24
      %s202 = smul.u32 %s35, 2
      %s203 = sadd.s32 %s202, %s31
      %s204 = ssub.s32 %s201, %s203
      %p205 = scmp.eq.s32.totalorder %s204, 0
      %s207 = sadd.s32 %s206, 1
      %s208 = scalar_select %p205, %s206, %s207
      %p211 = pneg %p205
      %p212 = scmp.eq.s32.totalorder %s16, 3
      %p213 = por %p211, %p212
      %p214 = scmp.ne.s32.totalorder %s206, %s209
      %p215 = scmp.eq.s32.totalorder %s16, 0
      %p216 = por %p214, %p215
      %p217 = scmp.ne.s32.totalorder %s206, %s209
      %p218 = scmp.eq.s32.totalorder %s21, 3
      %p219 = por %p217, %p218
      %p220 = scmp.ne.s32.totalorder %s209, %s210
      %p221 = scmp.eq.s32.totalorder %s21, 0
      %p222 = por %p220, %p221
      %p223 = scmp.ne.s32.totalorder %s209, %s210
      %p224 = scmp.eq.s32.totalorder %s22, 3
      %p225 = por %p223, %p224
      %p227 = scmp.ne.s32.totalorder %s210, %s226
      %p228 = scmp.eq.s32.totalorder %s22, 0
      %p229 = por %p227, %p228
      %p230 = scmp.le.s32.totalorder 1, %s16
      %p231 = scmp.lt.s32.totalorder %s16, 5
      %p232 = pnand %p230, %p231
      %p233 = pneg %p232
      // Predicated region
      $region9: #{tpu_custom_call.1} parent=5 // pred_check
        _
      $region10: #{tpu_custom_call.1} parent=5 // pred_check_branch
        %235 = sbr.rel (%p232) target = $region12
      $region11: #{tpu_custom_call.1} parent=5 // pred_region
        %s236 = ssub.s32 %s16, 1
        // Predicated region
        $region13: #{tpu_custom_call.1} parent=11 // pred_check
          %p237 = pneg %p129
        $region14: #{tpu_custom_call.1} parent=11 // pred_check_branch
          %239 = sbr.rel (%p237) target = $region16
        $region15: #{tpu_custom_call.1} parent=11 // pred_region
          _
        $region16: #{tpu_custom_call.1} parent=11 // pred_fallthru
          _
        // Predicated region
        $region17: #{tpu_custom_call.1} parent=11 // pred_check
          %p240 = pneg %p150
        $region18: #{tpu_custom_call.1} parent=11 // pred_check_branch
          %242 = sbr.rel (%p240) target = $region20
        $region19: #{tpu_custom_call.1} parent=11 // pred_region
          _
        $region20: #{tpu_custom_call.1} parent=11 // pred_fallthru
          _
        // Predicated region
        $region21: #{tpu_custom_call.1} parent=11 // pred_check
          %p243 = pneg %p171
        $region22: #{tpu_custom_call.1} parent=11 // pred_check_branch
          %245 = sbr.rel (%p243) target = $region24
        $region23: #{tpu_custom_call.1} parent=11 // pred_region
          _
        $region24: #{tpu_custom_call.1} parent=11 // pred_fallthru
          _
        // Predicated region
        $region25: #{tpu_custom_call.1} parent=11 // pred_check
          %p246 = pneg %p192
        $region26: #{tpu_custom_call.1} parent=11 // pred_check_branch
          %248 = sbr.rel (%p246) target = $region28
        $region27: #{tpu_custom_call.1} parent=11 // pred_region
          _
        $region28: #{tpu_custom_call.1} parent=11 // pred_fallthru
          _
      $region12: #{tpu_custom_call.1} parent=5 // pred_fallthru
        _
      %p249 = scmp.lt.s32.totalorder %s16, 4
      // Predicated region
      $region29: #{tpu_custom_call.1} parent=5 // pred_check
        %p250 = pneg %p249
      $region30: #{tpu_custom_call.1} parent=5 // pred_check_branch
        %252 = sbr.rel (%p250) target = $region32
      $region31: #{tpu_custom_call.1} parent=5 // pred_region
        // Predicated region
        $region33: #{tpu_custom_call.1} parent=31 // pred_check
          %p253 = pneg %p50
        $region34: #{tpu_custom_call.1} parent=31 // pred_check_branch
          %255 = sbr.rel (%p253) target = $region36
        $region35: #{tpu_custom_call.1} parent=31 // pred_region
          %s256 = smul.u32 16, %s24
          %p257 = scmp.lt.s32.totalorder %s23, 1
          %s258 = scalar_select %p257, %s23, 1
          %p259 = scmp.lt.s32.totalorder %s256, 31
          %s260 = scalar_select %p259, %s256, 31
          %s261 = smul.addr %s258, 32
          %s262 = sadd.s32 %s260, %s261
          %s263 = smul.addr %s262, 4
          %s264 = scalar_lea.vmem %s0, %s263
          %s265 = smul.u32 16, %s24
        $region36: #{tpu_custom_call.1} parent=31 // pred_fallthru
          _
        // Predicated region
        $region37: #{tpu_custom_call.1} parent=31 // pred_check
          %p266 = pneg %p76
        $region38: #{tpu_custom_call.1} parent=31 // pred_check_branch
          %268 = sbr.rel (%p266) target = $region40
        $region39: #{tpu_custom_call.1} parent=31 // pred_region
          %p269 = scmp.lt.s32.totalorder %s23, 1
          %s270 = scalar_select %p269, %s23, 1
          %s271 = smul.addr %s270, 4
          %s272 = scalar_lea.vmem %s1, %s271
        $region40: #{tpu_custom_call.1} parent=31 // pred_fallthru
          _
        // Predicated region
        $region41: #{tpu_custom_call.1} parent=31 // pred_check
          %p273 = pneg %p102
        $region42: #{tpu_custom_call.1} parent=31 // pred_check_branch
          %275 = sbr.rel (%p273) target = $region44
        $region43: #{tpu_custom_call.1} parent=31 // pred_region
          %p276 = scmp.lt.s32.totalorder %s23, 1
          %s277 = scalar_select %p276, %s23, 1
          %s278 = scalar_lea.vmem %s2, %s277
        $region44: #{tpu_custom_call.1} parent=31 // pred_fallthru
          _
      $region32: #{tpu_custom_call.1} parent=5 // pred_fallthru
        _
      %p279 = scmp.le.s32.totalorder 1, %s16
      %p280 = scmp.lt.s32.totalorder %s16, 5
      %p281 = pnand %p279, %p280
      %p282 = pneg %p281
      // Predicated region
      $region45: #{tpu_custom_call.1} parent=5 // pred_check
        _
      $region46: #{tpu_custom_call.1} parent=5 // pred_check_branch
        %284 = sbr.rel (%p281) target = $region48
      $region47: #{tpu_custom_call.1} parent=5 // pred_region
        %s285 = ssub.s32 %s16, 1
        %s286 = smul.u32 16, %s26
        %p287 = scmp.lt.s32.totalorder %s25, 1
        %s288 = scalar_select %p287, %s25, 1
        %p289 = scmp.lt.s32.totalorder %s286, 31
        %s290 = scalar_select %p289, %s286, 31
        %s291 = smul.addr %s288, 32
        %s292 = sadd.s32 %s290, %s291
        %s293 = smul.addr %s292, 4
        %s294 = scalar_lea.vmem %s0, %s293
        %p295 = pneg %p56
        %p296 = pneg %p53
        %p297 = scmp.lt.s32.totalorder %s25, 1
        %s298 = scalar_select %p297, %s25, 1
        %s299 = smul.addr %s298, 4
        %s300 = scalar_lea.vmem %s1, %s299
        %p301 = pneg %p82
        %p302 = pneg %p79
        %p303 = scmp.lt.s32.totalorder %s25, 1
        %s304 = scalar_select %p303, %s25, 1
        %s305 = scalar_lea.vmem %s2, %s304
        %p306 = pneg %p108
        %p307 = pneg %p105
        %p308 = pneg %p129
        %p309 = pneg %p126
        %p310 = pneg %p150
        %p311 = pneg %p147
        %p312 = pneg %p171
        %p313 = pneg %p168
        %p314 = pneg %p192
        %p315 = pneg %p189
        %p316 = pneg %p222
        %p317 = pneg %p219
        %s318 = sand.u32 %s209, 1
        %s319 = scalar_lea.sflag [#allocation3], %s318
        %s320 = sand.u32 %s209, 1
        %s321 = scalar_lea.vmem [#allocation2], %s320
        %s322 = smul.u32 16, %s26
        %p323 = scmp.lt.s32.totalorder %s25, 1
        %s324 = scalar_select %p323, %s25, 1
        %p325 = scmp.lt.s32.totalorder %s322, 31
        %s326 = scalar_select %p325, %s322, 31
        %s327 = smul.addr %s324, 32
        %s328 = sadd.s32 %s326, %s327
        %s329 = smul.addr %s328, 4
        %s330 = scalar_lea.vmem %s0, %s329
        %s331 = smul.u32 16, %s26
        %p332 = scmp.lt.s32.totalorder %s25, 1
        %s333 = scalar_select %p332, %s25, 1
        %s334 = smul.addr %s333, 4
        %s335 = scalar_lea.vmem %s1, %s334
        %p336 = scmp.lt.s32.totalorder %s25, 1
        %s337 = scalar_select %p336, %s25, 1
        %s338 = scalar_lea.vmem %s2, %s337
        %s339 = smul.u32 %s25, 2
        %s340 = sadd.s32 %s339, %s26
        %v342 = vld [vmem:[%s330] sm:$0xf]
        %v343 = vld [vmem:[%s330 + $0x4] sm:$0xf]
        %v344 = vld [vmem:[%s330 + $0x8] sm:$0xf]
        %v345 = vld [vmem:[%s330 + $0xc] sm:$0xf]
        %v346 = vld [vmem:[%s330 + $0x10] sm:$0xf]
        %v347 = vld [vmem:[%s330 + $0x14] sm:$0xf]
        %v348 = vld [vmem:[%s330 + $0x18] sm:$0xf]
        %v349 = vld [vmem:[%s330 + $0x1c] sm:$0xf]
        %v350 = vld [vmem:[%s330 + $0x20] sm:$0xf]
        %v351 = vld [vmem:[%s330 + $0x24] sm:$0xf]
        %v352 = vld [vmem:[%s330 + $0x28] sm:$0xf]
        %v353 = vld [vmem:[%s330 + $0x2c] sm:$0xf]
        %v354 = vld [vmem:[%s330 + $0x30] sm:$0xf]
        %v355 = vld [vmem:[%s330 + $0x34] sm:$0xf]
        %v356 = vld [vmem:[%s330 + $0x38] sm:$0xf]
        %v357 = vld [vmem:[%s330 + $0x3c] sm:$0xf]
        %v358 = vunpack.c.l.bf16 %v342
        %v359 = vunpack.c.l.bf16 %v343
        %v360 = vunpack.c.l.bf16 %v344
        %v361 = vunpack.c.l.bf16 %v345
        %v362 = vunpack.c.l.bf16 %v346
        %v363 = vunpack.c.l.bf16 %v347
        %v364 = vunpack.c.l.bf16 %v348
        %v365 = vunpack.c.l.bf16 %v349
        %v366 = vunpack.c.l.bf16 %v350
        %v367 = vunpack.c.l.bf16 %v351
        %v368 = vunpack.c.l.bf16 %v352
        %v369 = vunpack.c.l.bf16 %v353
        %v370 = vunpack.c.l.bf16 %v354
        %v371 = vunpack.c.l.bf16 %v355
        %v372 = vunpack.c.l.bf16 %v356
        %v373 = vunpack.c.l.bf16 %v357
        %v374 = vld [vmem:[%s335] sm:$0x7]
        %376 = vset.pattern.permute.xlu0 0
        %377 = vperm.xlu0 %376, %v358
        %v378 = vpop.permute.xlu0 %377
        %381 = vset.pattern.permute.xlu0 0
        %382 = vperm.xlu0 %381, %v359
        %v383 = vpop.permute.xlu0 %382
        %386 = vset.pattern.permute.xlu0 0
        %387 = vperm.xlu0 %386, %v360
        %v388 = vpop.permute.xlu0 %387
        %391 = vset.pattern.permute.xlu0 0
        %392 = vperm.xlu0 %391, %v361
        %v393 = vpop.permute.xlu0 %392
        %396 = vset.pattern.permute.xlu0 0
        %397 = vperm.xlu0 %396, %v362
        %v398 = vpop.permute.xlu0 %397
        %401 = vset.pattern.permute.xlu0 0
        %402 = vperm.xlu0 %401, %v363
        %v403 = vpop.permute.xlu0 %402
        %406 = vset.pattern.permute.xlu0 0
        %407 = vperm.xlu0 %406, %v364
        %v408 = vpop.permute.xlu0 %407
        %411 = vset.pattern.permute.xlu0 0
        %412 = vperm.xlu0 %411, %v365
        %v413 = vpop.permute.xlu0 %412
        %416 = vset.pattern.permute.xlu0 0
        %417 = vperm.xlu0 %416, %v366
        %v418 = vpop.permute.xlu0 %417
        %421 = vset.pattern.permute.xlu0 0
        %422 = vperm.xlu0 %421, %v367
        %v423 = vpop.permute.xlu0 %422
        %426 = vset.pattern.permute.xlu0 0
        %427 = vperm.xlu0 %426, %v368
        %v428 = vpop.permute.xlu0 %427
        %431 = vset.pattern.permute.xlu0 0
        %432 = vperm.xlu0 %431, %v369
        %v433 = vpop.permute.xlu0 %432
        %436 = vset.pattern.permute.xlu0 0
        %437 = vperm.xlu0 %436, %v370
        %v438 = vpop.permute.xlu0 %437
        %441 = vset.pattern.permute.xlu0 0
        %442 = vperm.xlu0 %441, %v371
        %v443 = vpop.permute.xlu0 %442
        %446 = vset.pattern.permute.xlu0 0
        %447 = vperm.xlu0 %446, %v372
        %v448 = vpop.permute.xlu0 %447
        %451 = vset.pattern.permute.xlu0 0
        %452 = vperm.xlu0 %451, %v373
        %v453 = vpop.permute.xlu0 %452
        %v455 = vlaneseq
        %v456 = vshrl.u32 %v455, 7
        %v457 = vsub.s32 0, %v456
        %v458 = vrot.slane %v374, %v457
        %v459 = vmul.f32 %v378, %v458
        %v460 = vmul.f32 %v383, %v458
        %v461 = vmul.f32 %v388, %v458
        %v462 = vmul.f32 %v393, %v458
        %v463 = vmul.f32 %v398, %v458
        %v464 = vmul.f32 %v403, %v458
        %v465 = vmul.f32 %v408, %v458
        %v466 = vmul.f32 %v413, %v458
        %v467 = vmul.f32 %v418, %v458
        %v468 = vmul.f32 %v423, %v458
        %v469 = vmul.f32 %v428, %v458
        %v470 = vmul.f32 %v433, %v458
        %v471 = vmul.f32 %v438, %v458
        %v472 = vmul.f32 %v443, %v458
        %v473 = vmul.f32 %v448, %v458
        %v474 = vmul.f32 %v453, %v458
        %475 = vset.pattern.permute.xlu0 1
        %476 = vperm.xlu0 %475, %v358
        %v477 = vpop.permute.xlu0 %476
        %479 = vset.pattern.permute.xlu0 1
        %480 = vperm.xlu0 %479, %v359
        %v481 = vpop.permute.xlu0 %480
        %483 = vset.pattern.permute.xlu0 1
        %484 = vperm.xlu0 %483, %v360
        %v485 = vpop.permute.xlu0 %484
        %487 = vset.pattern.permute.xlu0 1
        %488 = vperm.xlu0 %487, %v361
        %v489 = vpop.permute.xlu0 %488
        %491 = vset.pattern.permute.xlu0 1
        %492 = vperm.xlu0 %491, %v362
        %v493 = vpop.permute.xlu0 %492
        %495 = vset.pattern.permute.xlu0 1
        %496 = vperm.xlu0 %495, %v363
        %v497 = vpop.permute.xlu0 %496
        %499 = vset.pattern.permute.xlu0 1
        %500 = vperm.xlu0 %499, %v364
        %v501 = vpop.permute.xlu0 %500
        %503 = vset.pattern.permute.xlu0 1
        %504 = vperm.xlu0 %503, %v365
        %v505 = vpop.permute.xlu0 %504
        %507 = vset.pattern.permute.xlu0 1
        %508 = vperm.xlu0 %507, %v366
        %v509 = vpop.permute.xlu0 %508
        %511 = vset.pattern.permute.xlu0 1
        %512 = vperm.xlu0 %511, %v367
        %v513 = vpop.permute.xlu0 %512
        %515 = vset.pattern.permute.xlu0 1
        %516 = vperm.xlu0 %515, %v368
        %v517 = vpop.permute.xlu0 %516
        %519 = vset.pattern.permute.xlu0 1
        %520 = vperm.xlu0 %519, %v369
        %v521 = vpop.permute.xlu0 %520
        %523 = vset.pattern.permute.xlu0 1
        %524 = vperm.xlu0 %523, %v370
        %v525 = vpop.permute.xlu0 %524
        %527 = vset.pattern.permute.xlu0 1
        %528 = vperm.xlu0 %527, %v371
        %v529 = vpop.permute.xlu0 %528
        %531 = vset.pattern.permute.xlu0 1
        %532 = vperm.xlu0 %531, %v372
        %v533 = vpop.permute.xlu0 %532
        %535 = vset.pattern.permute.xlu0 1
        %536 = vperm.xlu0 %535, %v373
        %v537 = vpop.permute.xlu0 %536
        %v539 = vlaneseq
        %v540 = vshrl.u32 %v539, 7
        %v541 = vsub.s32 1, %v540
        %v542 = vrot.slane %v374, %v541
        %v543 = vmul.f32 %v477, %v542
        %v544 = vmul.f32 %v481, %v542
        %v545 = vmul.f32 %v485, %v542
        %v546 = vmul.f32 %v489, %v542
        %v547 = vmul.f32 %v493, %v542
        %v548 = vmul.f32 %v497, %v542
        %v549 = vmul.f32 %v501, %v542
        %v550 = vmul.f32 %v505, %v542
        %v551 = vmul.f32 %v509, %v542
        %v552 = vmul.f32 %v513, %v542
        %v553 = vmul.f32 %v517, %v542
        %v554 = vmul.f32 %v521, %v542
        %v555 = vmul.f32 %v525, %v542
        %v556 = vmul.f32 %v529, %v542
        %v557 = vmul.f32 %v533, %v542
        %v558 = vmul.f32 %v537, %v542
        %v559 = vadd.f32 %v459, %v543
        %v560 = vadd.f32 %v460, %v544
        %v561 = vadd.f32 %v461, %v545
        %v562 = vadd.f32 %v462, %v546
        %v563 = vadd.f32 %v463, %v547
        %v564 = vadd.f32 %v464, %v548
        %v565 = vadd.f32 %v465, %v549
        %v566 = vadd.f32 %v466, %v550
        %v567 = vadd.f32 %v467, %v551
        %v568 = vadd.f32 %v468, %v552
        %v569 = vadd.f32 %v469, %v553
        %v570 = vadd.f32 %v470, %v554
        %v571 = vadd.f32 %v471, %v555
        %v572 = vadd.f32 %v472, %v556
        %v573 = vadd.f32 %v473, %v557
        %v574 = vadd.f32 %v474, %v558
        %575 = vset.pattern.permute.xlu0 2
        %576 = vperm.xlu0 %575, %v358
        %v577 = vpop.permute.xlu0 %576
        %579 = vset.pattern.permute.xlu0 2
        %580 = vperm.xlu0 %579, %v359
        %v581 = vpop.permute.xlu0 %580
        %583 = vset.pattern.permute.xlu0 2
        %584 = vperm.xlu0 %583, %v360
        %v585 = vpop.permute.xlu0 %584
        %587 = vset.pattern.permute.xlu0 2
        %588 = vperm.xlu0 %587, %v361
        %v589 = vpop.permute.xlu0 %588
        %591 = vset.pattern.permute.xlu0 2
        %592 = vperm.xlu0 %591, %v362
        %v593 = vpop.permute.xlu0 %592
        %595 = vset.pattern.permute.xlu0 2
        %596 = vperm.xlu0 %595, %v363
        %v597 = vpop.permute.xlu0 %596
        %599 = vset.pattern.permute.xlu0 2
        %600 = vperm.xlu0 %599, %v364
        %v601 = vpop.permute.xlu0 %600
        %603 = vset.pattern.permute.xlu0 2
        %604 = vperm.xlu0 %603, %v365
        %v605 = vpop.permute.xlu0 %604
        %607 = vset.pattern.permute.xlu0 2
        %608 = vperm.xlu0 %607, %v366
        %v609 = vpop.permute.xlu0 %608
        %611 = vset.pattern.permute.xlu0 2
        %612 = vperm.xlu0 %611, %v367
        %v613 = vpop.permute.xlu0 %612
        %615 = vset.pattern.permute.xlu0 2
        %616 = vperm.xlu0 %615, %v368
        %v617 = vpop.permute.xlu0 %616
        %619 = vset.pattern.permute.xlu0 2
        %620 = vperm.xlu0 %619, %v369
        %v621 = vpop.permute.xlu0 %620
        %623 = vset.pattern.permute.xlu0 2
        %624 = vperm.xlu0 %623, %v370
        %v625 = vpop.permute.xlu0 %624
        %627 = vset.pattern.permute.xlu0 2
        %628 = vperm.xlu0 %627, %v371
        %v629 = vpop.permute.xlu0 %628
        %631 = vset.pattern.permute.xlu0 2
        %632 = vperm.xlu0 %631, %v372
        %v633 = vpop.permute.xlu0 %632
        %635 = vset.pattern.permute.xlu0 2
        %636 = vperm.xlu0 %635, %v373
        %v637 = vpop.permute.xlu0 %636
        %v639 = vlaneseq
        %v640 = vshrl.u32 %v639, 7
        %v641 = vsub.s32 2, %v640
        %v642 = vrot.slane %v374, %v641
        %v643 = vmul.f32 %v577, %v642
        %v644 = vmul.f32 %v581, %v642
        %v645 = vmul.f32 %v585, %v642
        %v646 = vmul.f32 %v589, %v642
        %v647 = vmul.f32 %v593, %v642
        %v648 = vmul.f32 %v597, %v642
        %v649 = vmul.f32 %v601, %v642
        %v650 = vmul.f32 %v605, %v642
        %v651 = vmul.f32 %v609, %v642
        %v652 = vmul.f32 %v613, %v642
        %v653 = vmul.f32 %v617, %v642
        %v654 = vmul.f32 %v621, %v642
        %v655 = vmul.f32 %v625, %v642
        %v656 = vmul.f32 %v629, %v642
        %v657 = vmul.f32 %v633, %v642
        %v658 = vmul.f32 %v637, %v642
        %v659 = vadd.f32 %v559, %v643
        %v660 = vadd.f32 %v560, %v644
        %v661 = vadd.f32 %v561, %v645
        %v662 = vadd.f32 %v562, %v646
        %v663 = vadd.f32 %v563, %v647
        %v664 = vadd.f32 %v564, %v648
        %v665 = vadd.f32 %v565, %v649
        %v666 = vadd.f32 %v566, %v650
        %v667 = vadd.f32 %v567, %v651
        %v668 = vadd.f32 %v568, %v652
        %v669 = vadd.f32 %v569, %v653
        %v670 = vadd.f32 %v570, %v654
        %v671 = vadd.f32 %v571, %v655
        %v672 = vadd.f32 %v572, %v656
        %v673 = vadd.f32 %v573, %v657
        %v674 = vadd.f32 %v574, %v658
        %v675 = vld [vmem:[%s338] sm:$0x1]
        %v677 = vlaneseq
        %v678 = vshrl.u32 %v677, 7
        %v679 = vsub.s32 0, %v678
        %v680 = vrot.slane %v675, %v679
        %v682 = vadd.f32 %v659, %v680
        %v683 = vadd.f32 %v660, %v680
        %v684 = vadd.f32 %v661, %v680
        %v685 = vadd.f32 %v662, %v680
        %v686 = vadd.f32 %v663, %v680
        %v687 = vadd.f32 %v664, %v680
        %v688 = vadd.f32 %v665, %v680
        %v689 = vadd.f32 %v666, %v680
        %v690 = vadd.f32 %v667, %v680
        %v691 = vadd.f32 %v668, %v680
        %v692 = vadd.f32 %v669, %v680
        %v693 = vadd.f32 %v670, %v680
        %v694 = vadd.f32 %v671, %v680
        %v695 = vadd.f32 %v672, %v680
        %v696 = vadd.f32 %v673, %v680
        %v697 = vadd.f32 %v674, %v680
        %v698 = vmax.f32 %v682, 0.0
        %v699 = vmax.f32 %v683, 0.0
        %v700 = vmax.f32 %v684, 0.0
        %v701 = vmax.f32 %v685, 0.0
        %v702 = vmax.f32 %v686, 0.0
        %v703 = vmax.f32 %v687, 0.0
        %v704 = vmax.f32 %v688, 0.0
        %v705 = vmax.f32 %v689, 0.0
        %v706 = vmax.f32 %v690, 0.0
        %v707 = vmax.f32 %v691, 0.0
        %v708 = vmax.f32 %v692, 0.0
        %v709 = vmax.f32 %v693, 0.0
        %v710 = vmax.f32 %v694, 0.0
        %v711 = vmax.f32 %v695, 0.0
        %v712 = vmax.f32 %v696, 0.0
        %v713 = vmax.f32 %v697, 0.0
        %v714 = vpack.c.bf16 %v699, %v698
        %v715 = vpack.c.bf16 %v701, %v700
        %v716 = vpack.c.bf16 %v703, %v702
        %v717 = vpack.c.bf16 %v705, %v704
        %v718 = vpack.c.bf16 %v707, %v706
        %v719 = vpack.c.bf16 %v709, %v708
        %v720 = vpack.c.bf16 %v711, %v710
        %v721 = vpack.c.bf16 %v713, %v712
        %v722 = vld [vmem:[%s3] sm:$0xf]
        %v723 = vld [vmem:[%s3 + $0x4] sm:$0xf]
        %v724 = vld [vmem:[%s3 + $0x8] sm:$0xf]
        %v725 = vld [vmem:[%s3 + $0xc] sm:$0xf]
        %v726 = vld [vmem:[%s3 + $0x10] sm:$0xf]
        %v727 = vld [vmem:[%s3 + $0x14] sm:$0xf]
        %v728 = vld [vmem:[%s3 + $0x18] sm:$0xf]
        %v729 = vld [vmem:[%s3 + $0x1c] sm:$0xf]
        %v730 = vld [vmem:[%s3 + $0x20] sm:$0xf]
        %v731 = vld [vmem:[%s3 + $0x24] sm:$0xf]
        %v732 = vld [vmem:[%s3 + $0x28] sm:$0xf]
        %v733 = vld [vmem:[%s3 + $0x2c] sm:$0xf]
        %v734 = vld [vmem:[%s3 + $0x30] sm:$0xf]
        %v735 = vld [vmem:[%s3 + $0x34] sm:$0xf]
        %v736 = vld [vmem:[%s3 + $0x38] sm:$0xf]
        %v737 = vld [vmem:[%s3 + $0x3c] sm:$0xf]
        %v738 = vld [vmem:[%s4] sm:$0x1]
        %v740 = vlaneseq
        %v741 = vshrl.u32 %v740, 7
        %v742 = vsub.s32 0, %v741
        %v743 = vrot.slane %v738, %v742
        %v761 = vunpack.c.l.b16 %v722
        %v762 = vunpack.c.l.b16 %v723
        %v763 = vunpack.c.l.b16 %v724
        %v764 = vunpack.c.l.b16 %v725
        %v765 = vunpack.c.l.b16 %v726
        %v766 = vunpack.c.l.b16 %v727
        %v767 = vunpack.c.l.b16 %v728
        %v768 = vunpack.c.l.b16 %v729
        %v769 = vunpack.c.l.b16 %v730
        %v770 = vunpack.c.l.b16 %v731
        %v771 = vunpack.c.l.b16 %v732
        %v772 = vunpack.c.l.b16 %v733
        %v773 = vunpack.c.l.b16 %v734
        %v774 = vunpack.c.l.b16 %v735
        %v775 = vunpack.c.l.b16 %v736
        %v776 = vunpack.c.l.b16 %v737
        %v777 = vpack.c.b16 %v762, %v761
        %v778 = vpack.c.b16 %v764, %v763
        %v779 = vpack.c.b16 %v766, %v765
        %v780 = vpack.c.b16 %v768, %v767
        %v781 = vpack.c.b16 %v770, %v769
        %v782 = vpack.c.b16 %v772, %v771
        %v783 = vpack.c.b16 %v774, %v773
        %v784 = vpack.c.b16 %v776, %v775
        %793 = vmatprep.subr.bf16.mxu0 0
        %794 = vmatpush1.bf16.msra.mxu0 %v777
        %795 = vmatprep.subr.bf16.mxu0 0
        %796 = vmatpush1.bf16.msra.mxu0 %v778
        %797 = vmatprep.subr.bf16.mxu0 0
        %798 = vmatpush1.bf16.msra.mxu0 %v779
        %799 = vmatprep.subr.bf16.mxu0 0
        %800 = vmatpush1.bf16.msra.mxu0 %v780
        %801 = vmatprep.subr.bf16.mxu0 0
        %802 = vmatpush1.bf16.msra.mxu0 %v781
        %803 = vmatprep.subr.bf16.mxu0 0
        %804 = vmatpush1.bf16.msra.mxu0 %v782
        %805 = vmatprep.subr.bf16.mxu0 0
        %806 = vmatpush1.bf16.msra.mxu0 %v783
        %807 = vmatprep.subr.bf16.mxu0 0
        %808 = vmatpush1.bf16.msra.mxu0 %v784
        %809 = vmatprep.subr.bf16.mxu0 0
        %810 = vmatpush1.bf16.msra.mxu0 0
        %811 = vmatprep.subr.bf16.mxu0 0
        %812 = vmatpush1.bf16.msra.mxu0 0
        %813 = vmatprep.subr.bf16.mxu0 0
        %814 = vmatpush1.bf16.msra.mxu0 0
        %815 = vmatprep.subr.bf16.mxu0 0
        %816 = vmatpush1.bf16.msra.mxu0 0
        %817 = vmatprep.subr.bf16.mxu0 0
        %818 = vmatpush1.bf16.msra.mxu0 0
        %819 = vmatprep.subr.bf16.mxu0 0
        %820 = vmatpush1.bf16.msra.mxu0 0
        %821 = vmatprep.subr.bf16.mxu0 0
        %822 = vmatpush1.bf16.msra.mxu0 0
        %823 = vmatprep.subr.bf16.mxu0 0
        %824 = vmatpush1.bf16.msra.mxu0 0
        %825 = vmatprep.mubr.bf16.mxu0 0
        %826 = vmatmul.mubr.bf16.gmra.mrb[0].mxu0 %v714
        %v827 = vpop.f32.mrb[0].mxu0
        %v828 = vadd.f32 %v743, %v827
        %v829 = vpop.f32.mrb[0].mxu0
        %v830 = vpop.f32.mrb[0].mxu0
        %v831 = vadd.f32 %v743, %v830
        %v832 = vpop.f32.mrb[0].mxu0
        %833 = vmatprep.mubr.bf16.mxu0 0
        %834 = vmatmul.mubr.bf16.gmra.mrb[0].mxu0 %v715
        %v835 = vpop.f32.mrb[0].mxu0
        %v836 = vadd.f32 %v743, %v835
        %v837 = vpop.f32.mrb[0].mxu0
        %v838 = vpop.f32.mrb[0].mxu0
        %v839 = vadd.f32 %v743, %v838
        %v840 = vpop.f32.mrb[0].mxu0
        %841 = vmatprep.mubr.bf16.mxu0 0
        %842 = vmatmul.mubr.bf16.gmra.mrb[0].mxu0 %v716
        %v843 = vpop.f32.mrb[0].mxu0
        %v844 = vadd.f32 %v743, %v843
        %v845 = vpop.f32.mrb[0].mxu0
        %v846 = vpop.f32.mrb[0].mxu0
        %v847 = vadd.f32 %v743, %v846
        %v848 = vpop.f32.mrb[0].mxu0
        %849 = vmatprep.mubr.bf16.mxu0 0
        %850 = vmatmul.mubr.bf16.gmra.mrb[0].mxu0 %v717
        %v851 = vpop.f32.mrb[0].mxu0
        %v852 = vadd.f32 %v743, %v851
        %v853 = vpop.f32.mrb[0].mxu0
        %v854 = vpop.f32.mrb[0].mxu0
        %v855 = vadd.f32 %v743, %v854
        %v856 = vpop.f32.mrb[0].mxu0
        %857 = vmatprep.mubr.bf16.mxu0 0
        %858 = vmatmul.mubr.bf16.gmra.mrb[0].mxu0 %v718
        %v859 = vpop.f32.mrb[0].mxu0
        %v860 = vadd.f32 %v743, %v859
        %v861 = vpop.f32.mrb[0].mxu0
        %v862 = vpop.f32.mrb[0].mxu0
        %v863 = vadd.f32 %v743, %v862
        %v864 = vpop.f32.mrb[0].mxu0
        %865 = vmatprep.mubr.bf16.mxu0 0
        %866 = vmatmul.mubr.bf16.gmra.mrb[0].mxu0 %v719
        %v867 = vpop.f32.mrb[0].mxu0
        %v868 = vadd.f32 %v743, %v867
        %v869 = vpop.f32.mrb[0].mxu0
        %v870 = vpop.f32.mrb[0].mxu0
        %v871 = vadd.f32 %v743, %v870
        %v872 = vpop.f32.mrb[0].mxu0
        %873 = vmatprep.mubr.bf16.mxu0 0
        %874 = vmatmul.mubr.bf16.gmra.mrb[0].mxu0 %v720
        %v875 = vpop.f32.mrb[0].mxu0
        %v876 = vadd.f32 %v743, %v875
        %v877 = vpop.f32.mrb[0].mxu0
        %v878 = vpop.f32.mrb[0].mxu0
        %v879 = vadd.f32 %v743, %v878
        %v880 = vpop.f32.mrb[0].mxu0
        %881 = vmatprep.mubr.bf16.mxu0 0
        %882 = vmatmul.mubr.bf16.gmra.mrb[0].mxu0 %v721
        %v883 = vpop.f32.mrb[0].mxu0
        %v884 = vadd.f32 %v743, %v883
        %v885 = vpop.f32.mrb[0].mxu0
        %v886 = vpop.f32.mrb[0].mxu0
        %v887 = vadd.f32 %v743, %v886
        %v888 = vpop.f32.mrb[0].mxu0
        %889 = vdwg.mxu0
        %v890 = vmax.f32 %v828, 0.0
        %v891 = vmax.f32 %v831, 0.0
        %v892 = vmax.f32 %v836, 0.0
        %v893 = vmax.f32 %v839, 0.0
        %v894 = vmax.f32 %v844, 0.0
        %v895 = vmax.f32 %v847, 0.0
        %v896 = vmax.f32 %v852, 0.0
        %v897 = vmax.f32 %v855, 0.0
        %v898 = vmax.f32 %v860, 0.0
        %v899 = vmax.f32 %v863, 0.0
        %v900 = vmax.f32 %v868, 0.0
        %v901 = vmax.f32 %v871, 0.0
        %v902 = vmax.f32 %v876, 0.0
        %v903 = vmax.f32 %v879, 0.0
        %v904 = vmax.f32 %v884, 0.0
        %v905 = vmax.f32 %v887, 0.0
        %v906 = vpack.c.bf16 %v891, %v890
        %v907 = vpack.c.bf16 %v893, %v892
        %v908 = vpack.c.bf16 %v895, %v894
        %v909 = vpack.c.bf16 %v897, %v896
        %v910 = vpack.c.bf16 %v899, %v898
        %v911 = vpack.c.bf16 %v901, %v900
        %v912 = vpack.c.bf16 %v903, %v902
        %v913 = vpack.c.bf16 %v905, %v904
        %v914 = vld [vmem:[%s5] sm:$0xf]
        %v915 = vld [vmem:[%s5 + $0x4] sm:$0xf]
        %v916 = vld [vmem:[%s5 + $0x8] sm:$0xf]
        %v917 = vld [vmem:[%s5 + $0xc] sm:$0xf]
        %v918 = vld [vmem:[%s5 + $0x10] sm:$0xf]
        %v919 = vld [vmem:[%s5 + $0x14] sm:$0xf]
        %v920 = vld [vmem:[%s5 + $0x18] sm:$0xf]
        %v921 = vld [vmem:[%s5 + $0x1c] sm:$0xf]
        %v922 = vld [vmem:[%s5 + $0x20] sm:$0xf]
        %v923 = vld [vmem:[%s5 + $0x24] sm:$0xf]
        %v924 = vld [vmem:[%s5 + $0x28] sm:$0xf]
        %v925 = vld [vmem:[%s5 + $0x2c] sm:$0xf]
        %v926 = vld [vmem:[%s5 + $0x30] sm:$0xf]
        %v927 = vld [vmem:[%s5 + $0x34] sm:$0xf]
        %v928 = vld [vmem:[%s5 + $0x38] sm:$0xf]
        %v929 = vld [vmem:[%s5 + $0x3c] sm:$0xf]
        %v930 = vld [vmem:[%s6] sm:$0x1]
        %v932 = vlaneseq
        %v933 = vshrl.u32 %v932, 7
        %v934 = vsub.s32 0, %v933
        %v935 = vrot.slane %v930, %v934
        %v953 = vunpack.c.l.b16 %v914
        %v954 = vunpack.c.l.b16 %v915
        %v955 = vunpack.c.l.b16 %v916
        %v956 = vunpack.c.l.b16 %v917
        %v957 = vunpack.c.l.b16 %v918
        %v958 = vunpack.c.l.b16 %v919
        %v959 = vunpack.c.l.b16 %v920
        %v960 = vunpack.c.l.b16 %v921
        %v961 = vunpack.c.l.b16 %v922
        %v962 = vunpack.c.l.b16 %v923
        %v963 = vunpack.c.l.b16 %v924
        %v964 = vunpack.c.l.b16 %v925
        %v965 = vunpack.c.l.b16 %v926
        %v966 = vunpack.c.l.b16 %v927
        %v967 = vunpack.c.l.b16 %v928
        %v968 = vunpack.c.l.b16 %v929
        %v969 = vpack.c.b16 %v954, %v953
        %v970 = vpack.c.b16 %v956, %v955
        %v971 = vpack.c.b16 %v958, %v957
        %v972 = vpack.c.b16 %v960, %v959
        %v973 = vpack.c.b16 %v962, %v961
        %v974 = vpack.c.b16 %v964, %v963
        %v975 = vpack.c.b16 %v966, %v965
        %v976 = vpack.c.b16 %v968, %v967
        %985 = vmatprep.subr.bf16.mxu0 0
        %986 = vmatpush1.bf16.msra.mxu0 %v969
        %987 = vmatprep.subr.bf16.mxu0 0
        %988 = vmatpush1.bf16.msra.mxu0 %v970
        %989 = vmatprep.subr.bf16.mxu0 0
        %990 = vmatpush1.bf16.msra.mxu0 %v971
        %991 = vmatprep.subr.bf16.mxu0 0
        %992 = vmatpush1.bf16.msra.mxu0 %v972
        %993 = vmatprep.subr.bf16.mxu0 0
        %994 = vmatpush1.bf16.msra.mxu0 %v973
        %995 = vmatprep.subr.bf16.mxu0 0
        %996 = vmatpush1.bf16.msra.mxu0 %v974
        %997 = vmatprep.subr.bf16.mxu0 0
        %998 = vmatpush1.bf16.msra.mxu0 %v975
        %999 = vmatprep.subr.bf16.mxu0 0
        %1000 = vmatpush1.bf16.msra.mxu0 %v976
        %1001 = vmatprep.subr.bf16.mxu0 0
        %1002 = vmatpush1.bf16.msra.mxu0 0
        %1003 = vmatprep.subr.bf16.mxu0 0
        %1004 = vmatpush1.bf16.msra.mxu0 0
        %1005 = vmatprep.subr.bf16.mxu0 0
        %1006 = vmatpush1.bf16.msra.mxu0 0
        %1007 = vmatprep.subr.bf16.mxu0 0
        %1008 = vmatpush1.bf16.msra.mxu0 0
        %1009 = vmatprep.subr.bf16.mxu0 0
        %1010 = vmatpush1.bf16.msra.mxu0 0
        %1011 = vmatprep.subr.bf16.mxu0 0
        %1012 = vmatpush1.bf16.msra.mxu0 0
        %1013 = vmatprep.subr.bf16.mxu0 0
        %1014 = vmatpush1.bf16.msra.mxu0 0
        %1015 = vmatprep.subr.bf16.mxu0 0
        %1016 = vmatpush1.bf16.msra.mxu0 0
        %1017 = vmatprep.mubr.bf16.mxu0 0
        %1018 = vmatmul.mubr.bf16.gmra.mrb[0].mxu0 %v906
        %v1019 = vpop.f32.mrb[0].mxu0
        %v1020 = vadd.f32 %v935, %v1019
        %v1021 = vpop.f32.mrb[0].mxu0
        %v1022 = vpop.f32.mrb[0].mxu0
        %v1023 = vadd.f32 %v935, %v1022
        %v1024 = vpop.f32.mrb[0].mxu0
        %1025 = vmatprep.mubr.bf16.mxu0 0
        %1026 = vmatmul.mubr.bf16.gmra.mrb[0].mxu0 %v907
        %v1027 = vpop.f32.mrb[0].mxu0
        %v1028 = vadd.f32 %v935, %v1027
        %v1029 = vpop.f32.mrb[0].mxu0
        %v1030 = vpop.f32.mrb[0].mxu0
        %v1031 = vadd.f32 %v935, %v1030
        %v1032 = vpop.f32.mrb[0].mxu0
        %1033 = vmatprep.mubr.bf16.mxu0 0
        %1034 = vmatmul.mubr.bf16.gmra.mrb[0].mxu0 %v908
        %v1035 = vpop.f32.mrb[0].mxu0
        %v1036 = vadd.f32 %v935, %v1035
        %v1037 = vpop.f32.mrb[0].mxu0
        %v1038 = vpop.f32.mrb[0].mxu0
        %v1039 = vadd.f32 %v935, %v1038
        %v1040 = vpop.f32.mrb[0].mxu0
        %1041 = vmatprep.mubr.bf16.mxu0 0
        %1042 = vmatmul.mubr.bf16.gmra.mrb[0].mxu0 %v909
        %v1043 = vpop.f32.mrb[0].mxu0
        %v1044 = vadd.f32 %v935, %v1043
        %v1045 = vpop.f32.mrb[0].mxu0
        %v1046 = vpop.f32.mrb[0].mxu0
        %v1047 = vadd.f32 %v935, %v1046
        %v1048 = vpop.f32.mrb[0].mxu0
        %1049 = vmatprep.mubr.bf16.mxu0 0
        %1050 = vmatmul.mubr.bf16.gmra.mrb[0].mxu0 %v910
        %v1051 = vpop.f32.mrb[0].mxu0
        %v1052 = vadd.f32 %v935, %v1051
        %v1053 = vpop.f32.mrb[0].mxu0
        %v1054 = vpop.f32.mrb[0].mxu0
        %v1055 = vadd.f32 %v935, %v1054
        %v1056 = vpop.f32.mrb[0].mxu0
        %1057 = vmatprep.mubr.bf16.mxu0 0
        %1058 = vmatmul.mubr.bf16.gmra.mrb[0].mxu0 %v911
        %v1059 = vpop.f32.mrb[0].mxu0
        %v1060 = vadd.f32 %v935, %v1059
        %v1061 = vpop.f32.mrb[0].mxu0
        %v1062 = vpop.f32.mrb[0].mxu0
        %v1063 = vadd.f32 %v935, %v1062
        %v1064 = vpop.f32.mrb[0].mxu0
        %1065 = vmatprep.mubr.bf16.mxu0 0
        %1066 = vmatmul.mubr.bf16.gmra.mrb[0].mxu0 %v912
        %v1067 = vpop.f32.mrb[0].mxu0
        %v1068 = vadd.f32 %v935, %v1067
        %v1069 = vpop.f32.mrb[0].mxu0
        %v1070 = vpop.f32.mrb[0].mxu0
        %v1071 = vadd.f32 %v935, %v1070
        %v1072 = vpop.f32.mrb[0].mxu0
        %1073 = vmatprep.mubr.bf16.mxu0 0
        %1074 = vmatmul.mubr.bf16.gmra.mrb[0].mxu0 %v913
        %v1075 = vpop.f32.mrb[0].mxu0
        %v1076 = vadd.f32 %v935, %v1075
        %v1077 = vpop.f32.mrb[0].mxu0
        %v1078 = vpop.f32.mrb[0].mxu0
        %v1079 = vadd.f32 %v935, %v1078
        %v1080 = vpop.f32.mrb[0].mxu0
        %1081 = vdwg.mxu0
        %v1082 = vmax.f32 %v1020, %v1036
        %v1083 = vmax.f32 %v1023, %v1039
        %v1084 = vmax.f32 %v1028, %v1044
        %v1085 = vmax.f32 %v1031, %v1047
        %v1086 = vmax.f32 %v1082, %v1052
        %v1087 = vmax.f32 %v1083, %v1055
        %v1088 = vmax.f32 %v1084, %v1060
        %v1089 = vmax.f32 %v1085, %v1063
        %v1090 = vmax.f32 %v1086, %v1068
        %v1091 = vmax.f32 %v1087, %v1071
        %v1092 = vmax.f32 %v1088, %v1076
        %v1093 = vmax.f32 %v1089, %v1079
        %v1094 = vmax.f32 %v1090, %v1091
        %v1095 = vmax.f32 %v1092, %v1093
        %v1096 = vmax.f32 %v1094, %v1095
        %v1097 = vrot.slane %v1096, 4
        %v1098 = vmax.f32 %v1096, %v1097
        %v1099 = vrot.slane %v1098, 2
        %v1100 = vmax.f32 %v1098, %v1099
        %v1101 = vrot.slane %v1100, 1
        %v1102 = vmax.f32 %v1100, %v1101
        %1103 = vst [vmem:[%s321] sm:$0x1] %v1102
        %s1104 = sand.u32 %s209, 1
        %s1105 = scalar_lea.sflag [#allocation3], %s1104
        %s1106 = sand.u32 %s209, 1
        %s1107 = scalar_lea.vmem [#allocation2], %s1106
        // Predicated region
        $region49: #{tpu_custom_call.1} parent=47 // pred_check
          %p1108 = pneg %p219
        $region50: #{tpu_custom_call.1} parent=47 // pred_check_branch
          %1110 = sbr.rel (%p1108) target = $region52
        $region51: #{tpu_custom_call.1} parent=47 // pred_region
          %s1111 = smul.u32 %s25, 2
          %s1112 = sadd.s32 %s1111, %s26
          %s1114 = ssub.s32 16, 16
          %1115 = vsyncadd %s1105, %s1114
          %s1116 = smul.addr %s1112, 16
          %s1117 = scalar_lea.hbm %s7, %s1116
          %s1119 = sshll.u32 %s1107, 4
          %s1120 = int_to_ptr.vmem [resolvable:$true] %s1119
          %1122 = dma.vmem_to_hbm [thread:$0]  %s1120, 16, %s1117, %s1105
        $region52: #{tpu_custom_call.1} parent=47 // pred_fallthru
          _
      $region48: #{tpu_custom_call.1} parent=5 // pred_fallthru
        _
      %p1123 = scmp.le.s32.totalorder 2, %s16
      // Predicated region
      $region53: #{tpu_custom_call.1} parent=5 // pred_check
        %p1124 = pneg %p1123
      $region54: #{tpu_custom_call.1} parent=5 // pred_check_branch
        %1126 = sbr.rel (%p1124) target = $region56
      $region55: #{tpu_custom_call.1} parent=5 // pred_region
        %s1127 = ssub.s32 %s16, 2
        // Predicated region
        $region57: #{tpu_custom_call.1} parent=55 // pred_check
          %p1128 = pneg %p225
        $region58: #{tpu_custom_call.1} parent=55 // pred_check_branch
          %1130 = sbr.rel (%p1128) target = $region60
        $region59: #{tpu_custom_call.1} parent=55 // pred_region
          %s1131 = sand.u32 %s210, 1
          %s1132 = scalar_lea.sflag [#allocation3], %s1131
          %s1133 = sand.u32 %s210, 1
          %s1134 = scalar_lea.vmem [#allocation2], %s1133
          %1135 = dma.done %s1132, 16
        $region60: #{tpu_custom_call.1} parent=55 // pred_fallthru
          _
      $region56: #{tpu_custom_call.1} parent=5 // pred_fallthru
        _
    $region6: #{tpu_custom_call.1} parent=1 // loop_footer
      %s20 = sadd.s32 1, %s16
    $region7: #{tpu_custom_call.1} parent=1 // loop_footer_branch
      %15 = sbr.rel target = $region3
    $region8: #{tpu_custom_call.1} parent=1 // loop_exit
      _
    %1136 = vsyncpa [#allocation3], 1
    %s1137 = scalar_lea.sflag [#allocation3], 1
    %1138 = vsyncpa %s1137, 1

// kernel: tpu_custom_call.1
$region0: #{tpu_custom_call.1}
  #allocation0 [shape = 'u32[]', space=smem, size = 0x4, offset = 0x4, fixed_abs, tag = 'smem constant byte address 0x4 - core index']
  #allocation1 [shape = 'u32[144,128]{1,0:T(1,128)}', space=vmem, size = 0x12000, scoped, tag = 'internal scratch']
  %s0 = inlined_call_operand.vmem [shape: bf16[2,256,3], index: 0, kind: input, shape index: {}]
  %s1 = inlined_call_operand.vmem [shape: f32[2,3,128], index: 1, kind: input, shape index: {}]
  %s2 = inlined_call_operand.vmem [shape: f32[2,1,128], index: 2, kind: input, shape index: {}]
  %s3 = inlined_call_operand.vmem [shape: bf16[128,128], index: 3, kind: input, shape index: {}]
  %s4 = inlined_call_operand.vmem [shape: f32[1,128], index: 4, kind: input, shape index: {}]
  %s5 = inlined_call_operand.vmem [shape: bf16[128,128], index: 5, kind: input, shape index: {}]
  %s6 = inlined_call_operand.vmem [shape: f32[1,128], index: 6, kind: input, shape index: {}]
  %s7 = inlined_call_operand.hbm [shape: f32[4,1,128], index: 7, kind: output, shape index: {}]
  %s8 = sld [smem:[#allocation0]]
  $region61: #{tpu_custom_call.1} parent=0
    _
  %s10 = ssub.s32 1, %s8
  %s11 = scalar_select 0, %s10, %s8
  $region1: #{tpu_custom_call.1} parent=0
    #allocation2 [shape = 'u8[1024]{0}', space=vmem, size = 0x400, scoped, tag = 'output window, operand 0']
    #allocation3 [shape = 's32[2]{0}', space=sflag, size = 0x8, scoped, tag = 'scoped memory for tpu_custom_call.1']
    %12 = vsyncpa [#allocation3], 0
    %s13 = scalar_lea.sflag [#allocation3], 1
    %14 = vsyncpa %s13, 0
    loop: start=0, step=1, limit=6
    $region2: #{tpu_custom_call.1} parent=1 // loop_pre_header
      _
    $region3: #{tpu_custom_call.1} parent=1 // loop_header
      %s16 = sphi 0, %s20
      %p17 = scmp.ge.s32.totalorder %s16, 6
      %s23 = sphi 0, %s35
      %s24 = sphi 0, %s31
      %s25 = sphi 0, %s23
      %s26 = sphi 0, %s24
      %s27 = sphi 0, %s25
      %s28 = sphi 0, %s26
      %s40 = sphi 0, %s42
      %s43 = sphi 0, %s40
      %s44 = sphi 0, %s43
      %s60 = sphi 0, %s44
      %s66 = sphi 0, %s68
      %s69 = sphi 0, %s66
      %s70 = sphi 0, %s69
      %s86 = sphi 0, %s70
      %s92 = sphi 0, %s94
      %s95 = sphi 0, %s92
      %s96 = sphi 0, %s95
      %s112 = sphi 0, %s96
      %s116 = sphi 0, %s116
      %s118 = sphi 0, %s116
      %s119 = sphi 0, %s118
      %s133 = sphi 0, %s119
      %s137 = sphi 0, %s137
      %s139 = sphi 0, %s137
      %s140 = sphi 0, %s139
      %s154 = sphi 0, %s140
      %s158 = sphi 0, %s158
      %s160 = sphi 0, %s158
      %s161 = sphi 0, %s160
      %s175 = sphi 0, %s161
      %s179 = sphi 0, %s179
      %s181 = sphi 0, %s179
      %s182 = sphi 0, %s181
      %s196 = sphi 0, %s182
      %s206 = sphi 0, %s208
      %s209 = sphi 0, %s206
      %s210 = sphi 0, %s209
      %s226 = sphi 0, %s210
    $region4: #{tpu_custom_call.1} parent=1 // loop_header_branch
      %19 = sbr.rel (%p17) target = $region8
    $region5: #{tpu_custom_call.1} parent=1 // loop_body
      %s21 = ssub.s32 %s16, 1
      %s22 = ssub.s32 %s16, 2
      %s29 = sadd.s32 1, %s24
      %p30 = scmp.ge.s32.totalorder %s29, 2
      %s31 = scalar_select %p30, 0, %s29
      %s32 = sadd.s32 1, %s23
      %s33 = scalar_select %p30, %s32, %s23
      %p34 = scmp.ge.s32.totalorder %s33, 2
      %s35 = scalar_select %p34, 0, %s33
      %s36 = ssub.s32 %s23, %s35
      %s37 = ssub.s32 %s24, %s31
      %s38 = sor.u32 %s36, %s37
      %p39 = scmp.eq.s32.totalorder %s38, 0
      %s41 = sadd.s32 %s40, 1
      %s42 = scalar_select %p39, %s40, %s41
      %p45 = pneg %p39
      %p46 = scmp.eq.s32.totalorder %s16, 3
      %p47 = por %p45, %p46
      %p48 = scmp.ne.s32.totalorder %s40, %s43
      %p49 = scmp.eq.s32.totalorder %s16, 0
      %p50 = por %p48, %p49
      %p51 = scmp.ne.s32.totalorder %s40, %s43
      %p52 = scmp.eq.s32.totalorder %s21, 3
      %p53 = por %p51, %p52
      %p54 = scmp.ne.s32.totalorder %s43, %s44
      %p55 = scmp.eq.s32.totalorder %s21, 0
      %p56 = por %p54, %p55
      %p57 = scmp.ne.s32.totalorder %s43, %s44
      %p58 = scmp.eq.s32.totalorder %s22, 3
      %p59 = por %p57, %p58
      %p61 = scmp.ne.s32.totalorder %s44, %s60
      %p62 = scmp.eq.s32.totalorder %s22, 0
      %p63 = por %p61, %p62
      %s64 = ssub.s32 %s23, %s35
      %p65 = scmp.eq.s32.totalorder %s64, 0
      %s67 = sadd.s32 %s66, 1
      %s68 = scalar_select %p65, %s66, %s67
      %p71 = pneg %p65
      %p72 = scmp.eq.s32.totalorder %s16, 3
      %p73 = por %p71, %p72
      %p74 = scmp.ne.s32.totalorder %s66, %s69
      %p75 = scmp.eq.s32.totalorder %s16, 0
      %p76 = por %p74, %p75
      %p77 = scmp.ne.s32.totalorder %s66, %s69
      %p78 = scmp.eq.s32.totalorder %s21, 3
      %p79 = por %p77, %p78
      %p80 = scmp.ne.s32.totalorder %s69, %s70
      %p81 = scmp.eq.s32.totalorder %s21, 0
      %p82 = por %p80, %p81
      %p83 = scmp.ne.s32.totalorder %s69, %s70
      %p84 = scmp.eq.s32.totalorder %s22, 3
      %p85 = por %p83, %p84
      %p87 = scmp.ne.s32.totalorder %s70, %s86
      %p88 = scmp.eq.s32.totalorder %s22, 0
      %p89 = por %p87, %p88
      %s90 = ssub.s32 %s23, %s35
      %p91 = scmp.eq.s32.totalorder %s90, 0
      %s93 = sadd.s32 %s92, 1
      %s94 = scalar_select %p91, %s92, %s93
      %p97 = pneg %p91
      %p98 = scmp.eq.s32.totalorder %s16, 3
      %p99 = por %p97, %p98
      %p100 = scmp.ne.s32.totalorder %s92, %s95
      %p101 = scmp.eq.s32.totalorder %s16, 0
      %p102 = por %p100, %p101
      %p103 = scmp.ne.s32.totalorder %s92, %s95
      %p104 = scmp.eq.s32.totalorder %s21, 3
      %p105 = por %p103, %p104
      %p106 = scmp.ne.s32.totalorder %s95, %s96
      %p107 = scmp.eq.s32.totalorder %s21, 0
      %p108 = por %p106, %p107
      %p109 = scmp.ne.s32.totalorder %s95, %s96
      %p110 = scmp.eq.s32.totalorder %s22, 3
      %p111 = por %p109, %p110
      %p113 = scmp.ne.s32.totalorder %s96, %s112
      %p114 = scmp.eq.s32.totalorder %s22, 0
      %p115 = por %p113, %p114
      %s117 = sadd.s32 %s116, 1
      %p120 = scmp.eq.s32.totalorder %s16, 3
      %p121 = scmp.ne.s32.totalorder %s116, %s118
      %p122 = scmp.eq.s32.totalorder %s16, 0
      %p123 = por %p121, %p122
      %p124 = scmp.ne.s32.totalorder %s116, %s118
      %p125 = scmp.eq.s32.totalorder %s21, 3
      %p126 = por %p124, %p125
      %p127 = scmp.ne.s32.totalorder %s118, %s119
      %p128 = scmp.eq.s32.totalorder %s21, 0
      %p129 = por %p127, %p128
      %p130 = scmp.ne.s32.totalorder %s118, %s119
      %p131 = scmp.eq.s32.totalorder %s22, 3
      %p132 = por %p130, %p131
      %p134 = scmp.ne.s32.totalorder %s119, %s133
      %p135 = scmp.eq.s32.totalorder %s22, 0
      %p136 = por %p134, %p135
      %s138 = sadd.s32 %s137, 1
      %p141 = scmp.eq.s32.totalorder %s16, 3
      %p142 = scmp.ne.s32.totalorder %s137, %s139
      %p143 = scmp.eq.s32.totalorder %s16, 0
      %p144 = por %p142, %p143
      %p145 = scmp.ne.s32.totalorder %s137, %s139
      %p146 = scmp.eq.s32.totalorder %s21, 3
      %p147 = por %p145, %p146
      %p148 = scmp.ne.s32.totalorder %s139, %s140
      %p149 = scmp.eq.s32.totalorder %s21, 0
      %p150 = por %p148, %p149
      %p151 = scmp.ne.s32.totalorder %s139, %s140
      %p152 = scmp.eq.s32.totalorder %s22, 3
      %p153 = por %p151, %p152
      %p155 = scmp.ne.s32.totalorder %s140, %s154
      %p156 = scmp.eq.s32.totalorder %s22, 0
      %p157 = por %p155, %p156
      %s159 = sadd.s32 %s158, 1
      %p162 = scmp.eq.s32.totalorder %s16, 3
      %p163 = scmp.ne.s32.totalorder %s158, %s160
      %p164 = scmp.eq.s32.totalorder %s16, 0
      %p165 = por %p163, %p164
      %p166 = scmp.ne.s32.totalorder %s158, %s160
      %p167 = scmp.eq.s32.totalorder %s21, 3
      %p168 = por %p166, %p167
      %p169 = scmp.ne.s32.totalorder %s160, %s161
      %p170 = scmp.eq.s32.totalorder %s21, 0
      %p171 = por %p169, %p170
      %p172 = scmp.ne.s32.totalorder %s160, %s161
      %p173 = scmp.eq.s32.totalorder %s22, 3
      %p174 = por %p172, %p173
      %p176 = scmp.ne.s32.totalorder %s161, %s175
      %p177 = scmp.eq.s32.totalorder %s22, 0
      %p178 = por %p176, %p177
      %s180 = sadd.s32 %s179, 1
      %p183 = scmp.eq.s32.totalorder %s16, 3
      %p184 = scmp.ne.s32.totalorder %s179, %s181
      %p185 = scmp.eq.s32.totalorder %s16, 0
      %p186 = por %p184, %p185
      %p187 = scmp.ne.s32.totalorder %s179, %s181
      %p188 = scmp.eq.s32.totalorder %s21, 3
      %p189 = por %p187, %p188
      %p190 = scmp.ne.s32.totalorder %s181, %s182
      %p191 = scmp.eq.s32.totalorder %s21, 0
      %p192 = por %p190, %p191
      %p193 = scmp.ne.s32.totalorder %s181, %s182
      %p194 = scmp.eq.s32.totalorder %s22, 3
      %p195 = por %p193, %p194
      %p197 = scmp.ne.s32.totalorder %s182, %s196
      %p198 = scmp.eq.s32.totalorder %s22, 0
      %p199 = por %p197, %p198
      %s200 = smul.u32 %s23, 2
      %s201 = sadd.s32 %s200, %s24
      %s202 = smul.u32 %s35, 2
      %s203 = sadd.s32 %s202, %s31
      %s204 = ssub.s32 %s201, %s203
      %p205 = scmp.eq.s32.totalorder %s204, 0
      %s207 = sadd.s32 %s206, 1
      %s208 = scalar_select %p205, %s206, %s207
      %p211 = pneg %p205
      %p212 = scmp.eq.s32.totalorder %s16, 3
      %p213 = por %p211, %p212
      %p214 = scmp.ne.s32.totalorder %s206, %s209
      %p215 = scmp.eq.s32.totalorder %s16, 0
      %p216 = por %p214, %p215
      %p217 = scmp.ne.s32.totalorder %s206, %s209
      %p218 = scmp.eq.s32.totalorder %s21, 3
      %p219 = por %p217, %p218
      %p220 = scmp.ne.s32.totalorder %s209, %s210
      %p221 = scmp.eq.s32.totalorder %s21, 0
      %p222 = por %p220, %p221
      %p223 = scmp.ne.s32.totalorder %s209, %s210
      %p224 = scmp.eq.s32.totalorder %s22, 3
      %p225 = por %p223, %p224
      %p227 = scmp.ne.s32.totalorder %s210, %s226
      %p228 = scmp.eq.s32.totalorder %s22, 0
      %p229 = por %p227, %p228
      %p230 = scmp.le.s32.totalorder 1, %s16
      %p231 = scmp.lt.s32.totalorder %s16, 5
      %p232 = pnand %p230, %p231
      %p233 = pneg %p232
      // Predicated region
      $region9: #{tpu_custom_call.1} parent=5 // pred_check
        _
      $region10: #{tpu_custom_call.1} parent=5 // pred_check_branch
        %235 = sbr.rel (%p232) target = $region12
      $region11: #{tpu_custom_call.1} parent=5 // pred_region
        %s236 = ssub.s32 %s16, 1
        // Predicated region
        $region13: #{tpu_custom_call.1} parent=11 // pred_check
          %p237 = pneg %p129
        $region14: #{tpu_custom_call.1} parent=11 // pred_check_branch
          %239 = sbr.rel (%p237) target = $region16
        $region15: #{tpu_custom_call.1} parent=11 // pred_region
          _
        $region16: #{tpu_custom_call.1} parent=11 // pred_fallthru
          _
        // Predicated region
        $region17: #{tpu_custom_call.1} parent=11 // pred_check
          %p240 = pneg %p150
        $region18: #{tpu_custom_call.1} parent=11 // pred_check_branch
          %242 = sbr.rel (%p240) target = $region20
        $region19: #{tpu_custom_call.1} parent=11 // pred_region
          _
        $region20: #{tpu_custom_call.1} parent=11 // pred_fallthru
          _
        // Predicated region
        $region21: #{tpu_custom_call.1} parent=11 // pred_check
          %p243 = pneg %p171
        $region22: #{tpu_custom_call.1} parent=11 // pred_check_branch
          %245 = sbr.rel (%p243) target = $region24
        $region23: #{tpu_custom_call.1} parent=11 // pred_region
          _
        $region24: #{tpu_custom_call.1} parent=11 // pred_fallthru
          _
        // Predicated region
        $region25: #{tpu_custom_call.1} parent=11 // pred_check
          %p246 = pneg %p192
        $region26: #{tpu_custom_call.1} parent=11 // pred_check_branch
          %248 = sbr.rel (%p246) target = $region28
        $region27: #{tpu_custom_call.1} parent=11 // pred_region
          _
        $region28: #{tpu_custom_call.1} parent=11 // pred_fallthru
          _
      $region12: #{tpu_custom_call.1} parent=5 // pred_fallthru
        _
      %p249 = scmp.lt.s32.totalorder %s16, 4
      // Predicated region
      $region29: #{tpu_custom_call.1} parent=5 // pred_check
        %p250 = pneg %p249
      $region30: #{tpu_custom_call.1} parent=5 // pred_check_branch
        %252 = sbr.rel (%p250) target = $region32
      $region31: #{tpu_custom_call.1} parent=5 // pred_region
        // Predicated region
        $region33: #{tpu_custom_call.1} parent=31 // pred_check
          %p253 = pneg %p50
        $region34: #{tpu_custom_call.1} parent=31 // pred_check_branch
          %255 = sbr.rel (%p253) target = $region36
        $region35: #{tpu_custom_call.1} parent=31 // pred_region
          %s256 = smul.u32 16, %s24
          %p257 = scmp.lt.s32.totalorder %s23, 1
          %s258 = scalar_select %p257, %s23, 1
          %p259 = scmp.lt.s32.totalorder %s256, 31
          %s260 = scalar_select %p259, %s256, 31
          %s261 = smul.addr %s258, 32
          %s262 = sadd.s32 %s260, %s261
          %s263 = smul.addr %s262, 4
          %s264 = scalar_lea.vmem %s0, %s263
          %s265 = smul.u32 16, %s24
        $region36: #{tpu_custom_call.1} parent=31 // pred_fallthru
          _
        // Predicated region
        $region37: #{tpu_custom_call.1} parent=31 // pred_check
          %p266 = pneg %p76
        $region38: #{tpu_custom_call.1} parent=31 // pred_check_branch
          %268 = sbr.rel (%p266) target = $region40
        $region39: #{tpu_custom_call.1} parent=31 // pred_region
          %p269 = scmp.lt.s32.totalorder %s23, 1
          %s270 = scalar_select %p269, %s23, 1
          %s271 = smul.addr %s270, 4
          %s272 = scalar_lea.vmem %s1, %s271
        $region40: #{tpu_custom_call.1} parent=31 // pred_fallthru
          _
        // Predicated region
        $region41: #{tpu_custom_call.1} parent=31 // pred_check
          %p273 = pneg %p102
        $region42: #{tpu_custom_call.1} parent=31 // pred_check_branch
          %275 = sbr.rel (%p273) target = $region44
        $region43: #{tpu_custom_call.1} parent=31 // pred_region
          %p276 = scmp.lt.s32.totalorder %s23, 1
          %s277 = scalar_select %p276, %s23, 1
          %s278 = scalar_lea.vmem %s2, %s277
        $region44: #{tpu_custom_call.1} parent=31 // pred_fallthru
          _
      $region32: #{tpu_custom_call.1} parent=5 // pred_fallthru
        _
      %p279 = scmp.le.s32.totalorder 1, %s16
      %p280 = scmp.lt.s32.totalorder %s16, 5
      %p281 = pnand %p279, %p280
      %p282 = pneg %p281
      // Predicated region
      $region45: #{tpu_custom_call.1} parent=5 // pred_check
        _
      $region46: #{tpu_custom_call.1} parent=5 // pred_check_branch
        %284 = sbr.rel (%p281) target = $region48
      $region47: #{tpu_custom_call.1} parent=5 // pred_region
        %s285 = ssub.s32 %s16, 1
        %s286 = smul.u32 16, %s26
        %p287 = scmp.lt.s32.totalorder %s25, 1
        %s288 = scalar_select %p287, %s25, 1
        %p289 = scmp.lt.s32.totalorder %s286, 31
        %s290 = scalar_select %p289, %s286, 31
        %s291 = smul.addr %s288, 32
        %s292 = sadd.s32 %s290, %s291
        %s293 = smul.addr %s292, 4
        %s294 = scalar_lea.vmem %s0, %s293
        %p295 = pneg %p56
        %p296 = pneg %p53
        %p297 = scmp.lt.s32.totalorder %s25, 1
        %s298 = scalar_select %p297, %s25, 1
        %s299 = smul.addr %s298, 4
        %s300 = scalar_lea.vmem %s1, %s299
        %p301 = pneg %p82
        %p302 = pneg %p79
        %p303 = scmp.lt.s32.totalorder %s25, 1
        %s304 = scalar_select %p303, %s25, 1
        %s305 = scalar_lea.vmem %s2, %s304
        %p306 = pneg %p108
        %p307 = pneg %p105
        %p308 = pneg %p129
        %p309 = pneg %p126
        %p310 = pneg %p150
        %p311 = pneg %p147
        %p312 = pneg %p171
        %p313 = pneg %p168
        %p314 = pneg %p192
        %p315 = pneg %p189
        %p316 = pneg %p222
        %p317 = pneg %p219
        %s318 = sand.u32 %s209, 1
        %s319 = scalar_lea.sflag [#allocation3], %s318
        %s320 = sand.u32 %s209, 1
        %s321 = scalar_lea.vmem [#allocation2], %s320
        %s322 = smul.u32 16, %s26
        %p323 = scmp.lt.s32.totalorder %s25, 1
        %s324 = scalar_select %p323, %s25, 1
        %p325 = scmp.lt.s32.totalorder %s322, 31
        %s326 = scalar_select %p325, %s322, 31
        %s327 = smul.addr %s324, 32
        %s328 = sadd.s32 %s326, %s327
        %s329 = smul.addr %s328, 4
        %s330 = scalar_lea.vmem %s0, %s329
        %s331 = smul.u32 16, %s26
        %p332 = scmp.lt.s32.totalorder %s25, 1
        %s333 = scalar_select %p332, %s25, 1
        %s334 = smul.addr %s333, 4
        %s335 = scalar_lea.vmem %s1, %s334
        %p336 = scmp.lt.s32.totalorder %s25, 1
        %s337 = scalar_select %p336, %s25, 1
        %s338 = scalar_lea.vmem %s2, %s337
        %s339 = smul.u32 %s25, 2
        %s340 = sadd.s32 %s339, %s26
        %v342 = vld [vmem:[%s330] sm:$0xf]
        %v343 = vld [vmem:[%s330 + $0x4] sm:$0xf]
        %v344 = vld [vmem:[%s330 + $0x8] sm:$0xf]
        %v345 = vld [vmem:[%s330 + $0xc] sm:$0xf]
        %v346 = vld [vmem:[%s330 + $0x10] sm:$0xf]
        %v347 = vld [vmem:[%s330 + $0x14] sm:$0xf]
        %v348 = vld [vmem:[%s330 + $0x18] sm:$0xf]
        %v349 = vld [vmem:[%s330 + $0x1c] sm:$0xf]
        %v350 = vld [vmem:[%s330 + $0x20] sm:$0xf]
        %v351 = vld [vmem:[%s330 + $0x24] sm:$0xf]
        %v352 = vld [vmem:[%s330 + $0x28] sm:$0xf]
        %v353 = vld [vmem:[%s330 + $0x2c] sm:$0xf]
        %v354 = vld [vmem:[%s330 + $0x30] sm:$0xf]
        %v355 = vld [vmem:[%s330 + $0x34] sm:$0xf]
        %v356 = vld [vmem:[%s330 + $0x38] sm:$0xf]
        %v357 = vld [vmem:[%s330 + $0x3c] sm:$0xf]
        %v358 = vunpack.c.l.bf16 %v342
        %v359 = vunpack.c.l.bf16 %v343
        %v360 = vunpack.c.l.bf16 %v344
        %v361 = vunpack.c.l.bf16 %v345
        %v362 = vunpack.c.l.bf16 %v346
        %v363 = vunpack.c.l.bf16 %v347
        %v364 = vunpack.c.l.bf16 %v348
        %v365 = vunpack.c.l.bf16 %v349
        %v366 = vunpack.c.l.bf16 %v350
        %v367 = vunpack.c.l.bf16 %v351
        %v368 = vunpack.c.l.bf16 %v352
        %v369 = vunpack.c.l.bf16 %v353
        %v370 = vunpack.c.l.bf16 %v354
        %v371 = vunpack.c.l.bf16 %v355
        %v372 = vunpack.c.l.bf16 %v356
        %v373 = vunpack.c.l.bf16 %v357
        %v374 = vld [vmem:[%s335] sm:$0x7]
        %376 = vset.pattern.permute.xlu0 0
        %377 = vperm.xlu0 %376, %v358
        %v378 = vpop.permute.xlu0 %377
        %381 = vset.pattern.permute.xlu0 0
        %382 = vperm.xlu0 %381, %v359
        %v383 = vpop.permute.xlu0 %382
        %386 = vset.pattern.permute.xlu0 0
        %387 = vperm.xlu0 %386, %v360
        %v388 = vpop.permute.xlu0 %387
        %391 = vset.pattern.permute.xlu0 0
        %392 = vperm.xlu0 %391, %v361
        %v393 = vpop.permute.xlu0 %392
        %396 = vset.pattern.permute.xlu0 0
        %397 = vperm.xlu0 %396, %v362
        %v398 = vpop.permute.xlu0 %397
        %401 = vset.pattern.permute.xlu0 0
        %402 = vperm.xlu0 %401, %v363
        %v403 = vpop.permute.xlu0 %402
        %406 = vset.pattern.permute.xlu0 0
        %407 = vperm.xlu0 %406, %v364
        %v408 = vpop.permute.xlu0 %407
        %411 = vset.pattern.permute.xlu0 0
        %412 = vperm.xlu0 %411, %v365
        %v413 = vpop.permute.xlu0 %412
        %416 = vset.pattern.permute.xlu0 0
        %417 = vperm.xlu0 %416, %v366
        %v418 = vpop.permute.xlu0 %417
        %421 = vset.pattern.permute.xlu0 0
        %422 = vperm.xlu0 %421, %v367
        %v423 = vpop.permute.xlu0 %422
        %426 = vset.pattern.permute.xlu0 0
        %427 = vperm.xlu0 %426, %v368
        %v428 = vpop.permute.xlu0 %427
        %431 = vset.pattern.permute.xlu0 0
        %432 = vperm.xlu0 %431, %v369
        %v433 = vpop.permute.xlu0 %432
        %436 = vset.pattern.permute.xlu0 0
        %437 = vperm.xlu0 %436, %v370
        %v438 = vpop.permute.xlu0 %437
        %441 = vset.pattern.permute.xlu0 0
        %442 = vperm.xlu0 %441, %v371
        %v443 = vpop.permute.xlu0 %442
        %446 = vset.pattern.permute.xlu0 0
        %447 = vperm.xlu0 %446, %v372
        %v448 = vpop.permute.xlu0 %447
        %451 = vset.pattern.permute.xlu0 0
        %452 = vperm.xlu0 %451, %v373
        %v453 = vpop.permute.xlu0 %452
        %v455 = vlaneseq
        %v456 = vshrl.u32 %v455, 7
        %v457 = vsub.s32 0, %v456
        %v458 = vrot.slane %v374, %v457
        %v459 = vmul.f32 %v378, %v458
        %v460 = vmul.f32 %v383, %v458
        %v461 = vmul.f32 %v388, %v458
        %v462 = vmul.f32 %v393, %v458
        %v463 = vmul.f32 %v398, %v458
        %v464 = vmul.f32 %v403, %v458
        %v465 = vmul.f32 %v408, %v458
        %v466 = vmul.f32 %v413, %v458
        %v467 = vmul.f32 %v418, %v458
        %v468 = vmul.f32 %v423, %v458
        %v469 = vmul.f32 %v428, %v458
        %v470 = vmul.f32 %v433, %v458
        %v471 = vmul.f32 %v438, %v458
        %v472 = vmul.f32 %v443, %v458
        %v473 = vmul.f32 %v448, %v458
        %v474 = vmul.f32 %v453, %v458
        %475 = vset.pattern.permute.xlu0 1
        %476 = vperm.xlu0 %475, %v358
        %v477 = vpop.permute.xlu0 %476
        %479 = vset.pattern.permute.xlu0 1
        %480 = vperm.xlu0 %479, %v359
        %v481 = vpop.permute.xlu0 %480
        %483 = vset.pattern.permute.xlu0 1
        %484 = vperm.xlu0 %483, %v360
        %v485 = vpop.permute.xlu0 %484
        %487 = vset.pattern.permute.xlu0 1
        %488 = vperm.xlu0 %487, %v361
        %v489 = vpop.permute.xlu0 %488
        %491 = vset.pattern.permute.xlu0 1
        %492 = vperm.xlu0 %491, %v362
        %v493 = vpop.permute.xlu0 %492
        %495 = vset.pattern.permute.xlu0 1
        %496 = vperm.xlu0 %495, %v363
        %v497 = vpop.permute.xlu0 %496
        %499 = vset.pattern.permute.xlu0 1
        %500 = vperm.xlu0 %499, %v364
        %v501 = vpop.permute.xlu0 %500
        %503 = vset.pattern.permute.xlu0 1
        %504 = vperm.xlu0 %503, %v365
        %v505 = vpop.permute.xlu0 %504
        %507 = vset.pattern.permute.xlu0 1
        %508 = vperm.xlu0 %507, %v366
        %v509 = vpop.permute.xlu0 %508
        %511 = vset.pattern.permute.xlu0 1
        %512 = vperm.xlu0 %511, %v367
        %v513 = vpop.permute.xlu0 %512
        %515 = vset.pattern.permute.xlu0 1
        %516 = vperm.xlu0 %515, %v368
        %v517 = vpop.permute.xlu0 %516
        %519 = vset.pattern.permute.xlu0 1
        %520 = vperm.xlu0 %519, %v369
        %v521 = vpop.permute.xlu0 %520
        %523 = vset.pattern.permute.xlu0 1
        %524 = vperm.xlu0 %523, %v370
        %v525 = vpop.permute.xlu0 %524
        %527 = vset.pattern.permute.xlu0 1
        %528 = vperm.xlu0 %527, %v371
        %v529 = vpop.permute.xlu0 %528
        %531 = vset.pattern.permute.xlu0 1
        %532 = vperm.xlu0 %531, %v372
        %v533 = vpop.permute.xlu0 %532
        %535 = vset.pattern.permute.xlu0 1
        %536 = vperm.xlu0 %535, %v373
        %v537 = vpop.permute.xlu0 %536
        %v539 = vlaneseq
        %v540 = vshrl.u32 %v539, 7
        %v541 = vsub.s32 1, %v540
        %v542 = vrot.slane %v374, %v541
        %v543 = vmul.f32 %v477, %v542
        %v544 = vmul.f32 %v481, %v542
        %v545 = vmul.f32 %v485, %v542
        %v546 = vmul.f32 %v489, %v542
        %v547 = vmul.f32 %v493, %v542
        %v548 = vmul.f32 %v497, %v542
        %v549 = vmul.f32 %v501, %v542
        %v550 = vmul.f32 %v505, %v542
        %v551 = vmul.f32 %v509, %v542
        %v552 = vmul.f32 %v513, %v542
        %v553 = vmul.f32 %v517, %v542
        %v554 = vmul.f32 %v521, %v542
        %v555 = vmul.f32 %v525, %v542
        %v556 = vmul.f32 %v529, %v542
        %v557 = vmul.f32 %v533, %v542
        %v558 = vmul.f32 %v537, %v542
        %v559 = vadd.f32 %v459, %v543
        %v560 = vadd.f32 %v460, %v544
        %v561 = vadd.f32 %v461, %v545
        %v562 = vadd.f32 %v462, %v546
        %v563 = vadd.f32 %v463, %v547
        %v564 = vadd.f32 %v464, %v548
        %v565 = vadd.f32 %v465, %v549
        %v566 = vadd.f32 %v466, %v550
        %v567 = vadd.f32 %v467, %v551
        %v568 = vadd.f32 %v468, %v552
        %v569 = vadd.f32 %v469, %v553
        %v570 = vadd.f32 %v470, %v554
        %v571 = vadd.f32 %v471, %v555
        %v572 = vadd.f32 %v472, %v556
        %v573 = vadd.f32 %v473, %v557
        %v574 = vadd.f32 %v474, %v558
        %575 = vset.pattern.permute.xlu0 2
        %576 = vperm.xlu0 %575, %v358
        %v577 = vpop.permute.xlu0 %576
        %579 = vset.pattern.permute.xlu0 2
        %580 = vperm.xlu0 %579, %v359
        %v581 = vpop.permute.xlu0 %580
        %583 = vset.pattern.permute.xlu0 2
        %584 = vperm.xlu0 %583, %v360
        %v585 = vpop.permute.xlu0 %584
        %587 = vset.pattern.permute.xlu0 2
        %588 = vperm.xlu0 %587, %v361
        %v589 = vpop.permute.xlu0 %588
        %591 = vset.pattern.permute.xlu0 2
        %592 = vperm.xlu0 %591, %v362
        %v593 = vpop.permute.xlu0 %592
        %595 = vset.pattern.permute.xlu0 2
        %596 = vperm.xlu0 %595, %v363
        %v597 = vpop.permute.xlu0 %596
        %599 = vset.pattern.permute.xlu0 2
        %600 = vperm.xlu0 %599, %v364
        %v601 = vpop.permute.xlu0 %600
        %603 = vset.pattern.permute.xlu0 2
        %604 = vperm.xlu0 %603, %v365
        %v605 = vpop.permute.xlu0 %604
        %607 = vset.pattern.permute.xlu0 2
        %608 = vperm.xlu0 %607, %v366
        %v609 = vpop.permute.xlu0 %608
        %611 = vset.pattern.permute.xlu0 2
        %612 = vperm.xlu0 %611, %v367
        %v613 = vpop.permute.xlu0 %612
        %615 = vset.pattern.permute.xlu0 2
        %616 = vperm.xlu0 %615, %v368
        %v617 = vpop.permute.xlu0 %616
        %619 = vset.pattern.permute.xlu0 2
        %620 = vperm.xlu0 %619, %v369
        %v621 = vpop.permute.xlu0 %620
        %623 = vset.pattern.permute.xlu0 2
        %624 = vperm.xlu0 %623, %v370
        %v625 = vpop.permute.xlu0 %624
        %627 = vset.pattern.permute.xlu0 2
        %628 = vperm.xlu0 %627, %v371
        %v629 = vpop.permute.xlu0 %628
        %631 = vset.pattern.permute.xlu0 2
        %632 = vperm.xlu0 %631, %v372
        %v633 = vpop.permute.xlu0 %632
        %635 = vset.pattern.permute.xlu0 2
        %636 = vperm.xlu0 %635, %v373
        %v637 = vpop.permute.xlu0 %636
        %v639 = vlaneseq
        %v640 = vshrl.u32 %v639, 7
        %v641 = vsub.s32 2, %v640
        %v642 = vrot.slane %v374, %v641
        %v643 = vmul.f32 %v577, %v642
        %v644 = vmul.f32 %v581, %v642
        %v645 = vmul.f32 %v585, %v642
        %v646 = vmul.f32 %v589, %v642
        %v647 = vmul.f32 %v593, %v642
        %v648 = vmul.f32 %v597, %v642
        %v649 = vmul.f32 %v601, %v642
        %v650 = vmul.f32 %v605, %v642
        %v651 = vmul.f32 %v609, %v642
        %v652 = vmul.f32 %v613, %v642
        %v653 = vmul.f32 %v617, %v642
        %v654 = vmul.f32 %v621, %v642
        %v655 = vmul.f32 %v625, %v642
        %v656 = vmul.f32 %v629, %v642
        %v657 = vmul.f32 %v633, %v642
        %v658 = vmul.f32 %v637, %v642
        %v659 = vadd.f32 %v559, %v643
        %v660 = vadd.f32 %v560, %v644
        %v661 = vadd.f32 %v561, %v645
        %v662 = vadd.f32 %v562, %v646
        %v663 = vadd.f32 %v563, %v647
        %v664 = vadd.f32 %v564, %v648
        %v665 = vadd.f32 %v565, %v649
        %v666 = vadd.f32 %v566, %v650
        %v667 = vadd.f32 %v567, %v651
        %v668 = vadd.f32 %v568, %v652
        %v669 = vadd.f32 %v569, %v653
        %v670 = vadd.f32 %v570, %v654
        %v671 = vadd.f32 %v571, %v655
        %v672 = vadd.f32 %v572, %v656
        %v673 = vadd.f32 %v573, %v657
        %v674 = vadd.f32 %v574, %v658
        %v675 = vld [vmem:[%s338] sm:$0x1]
        %v677 = vlaneseq
        %v678 = vshrl.u32 %v677, 7
        %v679 = vsub.s32 0, %v678
        %v680 = vrot.slane %v675, %v679
        %v682 = vadd.f32 %v659, %v680
        %v683 = vadd.f32 %v660, %v680
        %v684 = vadd.f32 %v661, %v680
        %v685 = vadd.f32 %v662, %v680
        %v686 = vadd.f32 %v663, %v680
        %v687 = vadd.f32 %v664, %v680
        %v688 = vadd.f32 %v665, %v680
        %v689 = vadd.f32 %v666, %v680
        %v690 = vadd.f32 %v667, %v680
        %v691 = vadd.f32 %v668, %v680
        %v692 = vadd.f32 %v669, %v680
        %v693 = vadd.f32 %v670, %v680
        %v694 = vadd.f32 %v671, %v680
        %v695 = vadd.f32 %v672, %v680
        %v696 = vadd.f32 %v673, %v680
        %v697 = vadd.f32 %v674, %v680
        %v698 = vmax.f32 %v682, 0.0
        %v699 = vmax.f32 %v683, 0.0
        %v700 = vmax.f32 %v684, 0.0
        %v701 = vmax.f32 %v685, 0.0
        %v702 = vmax.f32 %v686, 0.0
        %v703 = vmax.f32 %v687, 0.0
        %v704 = vmax.f32 %v688, 0.0
        %v705 = vmax.f32 %v689, 0.0
        %v706 = vmax.f32 %v690, 0.0
        %v707 = vmax.f32 %v691, 0.0
        %v708 = vmax.f32 %v692, 0.0
        %v709 = vmax.f32 %v693, 0.0
        %v710 = vmax.f32 %v694, 0.0
        %v711 = vmax.f32 %v695, 0.0
        %v712 = vmax.f32 %v696, 0.0
        %v713 = vmax.f32 %v697, 0.0
        %v714 = vpack.c.bf16 %v699, %v698
        %v715 = vpack.c.bf16 %v701, %v700
        %v716 = vpack.c.bf16 %v703, %v702
        %v717 = vpack.c.bf16 %v705, %v704
        %v718 = vpack.c.bf16 %v707, %v706
        %v719 = vpack.c.bf16 %v709, %v708
        %v720 = vpack.c.bf16 %v711, %v710
        %v721 = vpack.c.bf16 %v713, %v712
        %v722 = vld [vmem:[%s3] sm:$0xf]
        %v723 = vld [vmem:[%s3 + $0x4] sm:$0xf]
        %v724 = vld [vmem:[%s3 + $0x8] sm:$0xf]
        %v725 = vld [vmem:[%s3 + $0xc] sm:$0xf]
        %v726 = vld [vmem:[%s3 + $0x10] sm:$0xf]
        %v727 = vld [vmem:[%s3 + $0x14] sm:$0xf]
        %v728 = vld [vmem:[%s3 + $0x18] sm:$0xf]
        %v729 = vld [vmem:[%s3 + $0x1c] sm:$0xf]
        %v730 = vld [vmem:[%s3 + $0x20] sm:$0xf]
        %v731 = vld [vmem:[%s3 + $0x24] sm:$0xf]
        %v732 = vld [vmem:[%s3 + $0x28] sm:$0xf]
        %v733 = vld [vmem:[%s3 + $0x2c] sm:$0xf]
        %v734 = vld [vmem:[%s3 + $0x30] sm:$0xf]
        %v735 = vld [vmem:[%s3 + $0x34] sm:$0xf]
        %v736 = vld [vmem:[%s3 + $0x38] sm:$0xf]
        %v737 = vld [vmem:[%s3 + $0x3c] sm:$0xf]
        %v738 = vld [vmem:[%s4] sm:$0x1]
        %v740 = vlaneseq
        %v741 = vshrl.u32 %v740, 7
        %v742 = vsub.s32 0, %v741
        %v743 = vrot.slane %v738, %v742
        %v761 = vunpack.c.l.b16 %v722
        %v762 = vunpack.c.l.b16 %v723
        %v763 = vunpack.c.l.b16 %v724
        %v764 = vunpack.c.l.b16 %v725
        %v765 = vunpack.c.l.b16 %v726
        %v766 = vunpack.c.l.b16 %v727
        %v767 = vunpack.c.l.b16 %v728
        %v768 = vunpack.c.l.b16 %v729
        %v769 = vunpack.c.l.b16 %v730
        %v770 = vunpack.c.l.b16 %v731
        %v771 = vunpack.c.l.b16 %v732
        %v772 = vunpack.c.l.b16 %v733
        %v773 = vunpack.c.l.b16 %v734
        %v774 = vunpack.c.l.b16 %v735
        %v775 = vunpack.c.l.b16 %v736
        %v776 = vunpack.c.l.b16 %v737
        %v777 = vpack.c.b16 %v762, %v761
        %v778 = vpack.c.b16 %v764, %v763
        %v779 = vpack.c.b16 %v766, %v765
        %v780 = vpack.c.b16 %v768, %v767
        %v781 = vpack.c.b16 %v770, %v769
        %v782 = vpack.c.b16 %v772, %v771
        %v783 = vpack.c.b16 %v774, %v773
        %v784 = vpack.c.b16 %v776, %v775
        %793 = vmatprep.subr.bf16.mxu0 0
        %794 = vmatpush1.bf16.msra.mxu0 %v777
        %795 = vmatprep.subr.bf16.mxu0 0
        %796 = vmatpush1.bf16.msra.mxu0 %v778
        %797 = vmatprep.subr.bf16.mxu0 0
        %798 = vmatpush1.bf16.msra.mxu0 %v779
        %799 = vmatprep.subr.bf16.mxu0 0
        %800 = vmatpush1.bf16.msra.mxu0 %v780
        %801 = vmatprep.subr.bf16.mxu0 0
        %802 = vmatpush1.bf16.msra.mxu0 %v781
        %803 = vmatprep.subr.bf16.mxu0 0
        %804 = vmatpush1.bf16.msra.mxu0 %v782
        %805 = vmatprep.subr.bf16.mxu0 0
        %806 = vmatpush1.bf16.msra.mxu0 %v783
        %807 = vmatprep.subr.bf16.mxu0 0
        %808 = vmatpush1.bf16.msra.mxu0 %v784
        %809 = vmatprep.subr.bf16.mxu0 0
        %810 = vmatpush1.bf16.msra.mxu0 0
        %811 = vmatprep.subr.bf16.mxu0 0
        %812 = vmatpush1.bf16.msra.mxu0 0
        %813 = vmatprep.subr.bf16.mxu0 0
        %814 = vmatpush1.bf16.msra.mxu0 0
        %815 = vmatprep.subr.bf16.mxu0 0
        %816 = vmatpush1.bf16.msra.mxu0 0
        %817 = vmatprep.subr.bf16.mxu0 0
        %818 = vmatpush1.bf16.msra.mxu0 0
        %819 = vmatprep.subr.bf16.mxu0 0
        %820 = vmatpush1.bf16.msra.mxu0 0
        %821 = vmatprep.subr.bf16.mxu0 0
        %822 = vmatpush1.bf16.msra.mxu0 0
        %823 = vmatprep.subr.bf16.mxu0 0
        %824 = vmatpush1.bf16.msra.mxu0 0
        %825 = vmatprep.mubr.bf16.mxu0 0
        %826 = vmatmul.mubr.bf16.gmra.mrb[0].mxu0 %v714
        %v827 = vpop.f32.mrb[0].mxu0
        %v828 = vadd.f32 %v743, %v827
        %v829 = vpop.f32.mrb[0].mxu0
        %v830 = vpop.f32.mrb[0].mxu0
        %v831 = vadd.f32 %v743, %v830
        %v832 = vpop.f32.mrb[0].mxu0
        %833 = vmatprep.mubr.bf16.mxu0 0
        %834 = vmatmul.mubr.bf16.gmra.mrb[0].mxu0 %v715
        %v835 = vpop.f32.mrb[0].mxu0
        %v836 = vadd.f32 %v743, %v835
        %v837 = vpop.f32.mrb[0].mxu0
        %v838 = vpop.f32.mrb[0].mxu0
        %v839 = vadd.f32 %v743, %v838
        %v840 = vpop.f32.mrb[0].mxu0
        %841 = vmatprep.mubr.bf16.mxu0 0
        %842 = vmatmul.mubr.bf16.gmra.mrb[0].mxu0 %v716
        %v843 = vpop.f32.mrb[0].mxu0
        %v844 = vadd.f32 %v743, %v843
        %v845 = vpop.f32.mrb[0].mxu0
        %v846 = vpop.f32.mrb[0].mxu0
        %v847 = vadd.f32 %v743, %v846
        %v848 = vpop.f32.mrb[0].mxu0
        %849 = vmatprep.mubr.bf16.mxu0 0
        %850 = vmatmul.mubr.bf16.gmra.mrb[0].mxu0 %v717
        %v851 = vpop.f32.mrb[0].mxu0
        %v852 = vadd.f32 %v743, %v851
        %v853 = vpop.f32.mrb[0].mxu0
        %v854 = vpop.f32.mrb[0].mxu0
        %v855 = vadd.f32 %v743, %v854
        %v856 = vpop.f32.mrb[0].mxu0
        %857 = vmatprep.mubr.bf16.mxu0 0
        %858 = vmatmul.mubr.bf16.gmra.mrb[0].mxu0 %v718
        %v859 = vpop.f32.mrb[0].mxu0
        %v860 = vadd.f32 %v743, %v859
        %v861 = vpop.f32.mrb[0].mxu0
        %v862 = vpop.f32.mrb[0].mxu0
        %v863 = vadd.f32 %v743, %v862
        %v864 = vpop.f32.mrb[0].mxu0
        %865 = vmatprep.mubr.bf16.mxu0 0
        %866 = vmatmul.mubr.bf16.gmra.mrb[0].mxu0 %v719
        %v867 = vpop.f32.mrb[0].mxu0
        %v868 = vadd.f32 %v743, %v867
        %v869 = vpop.f32.mrb[0].mxu0
        %v870 = vpop.f32.mrb[0].mxu0
        %v871 = vadd.f32 %v743, %v870
        %v872 = vpop.f32.mrb[0].mxu0
        %873 = vmatprep.mubr.bf16.mxu0 0
        %874 = vmatmul.mubr.bf16.gmra.mrb[0].mxu0 %v720
        %v875 = vpop.f32.mrb[0].mxu0
        %v876 = vadd.f32 %v743, %v875
        %v877 = vpop.f32.mrb[0].mxu0
        %v878 = vpop.f32.mrb[0].mxu0
        %v879 = vadd.f32 %v743, %v878
        %v880 = vpop.f32.mrb[0].mxu0
        %881 = vmatprep.mubr.bf16.mxu0 0
        %882 = vmatmul.mubr.bf16.gmra.mrb[0].mxu0 %v721
        %v883 = vpop.f32.mrb[0].mxu0
        %v884 = vadd.f32 %v743, %v883
        %v885 = vpop.f32.mrb[0].mxu0
        %v886 = vpop.f32.mrb[0].mxu0
        %v887 = vadd.f32 %v743, %v886
        %v888 = vpop.f32.mrb[0].mxu0
        %889 = vdwg.mxu0
        %v890 = vmax.f32 %v828, 0.0
        %v891 = vmax.f32 %v831, 0.0
        %v892 = vmax.f32 %v836, 0.0
        %v893 = vmax.f32 %v839, 0.0
        %v894 = vmax.f32 %v844, 0.0
        %v895 = vmax.f32 %v847, 0.0
        %v896 = vmax.f32 %v852, 0.0
        %v897 = vmax.f32 %v855, 0.0
        %v898 = vmax.f32 %v860, 0.0
        %v899 = vmax.f32 %v863, 0.0
        %v900 = vmax.f32 %v868, 0.0
        %v901 = vmax.f32 %v871, 0.0
        %v902 = vmax.f32 %v876, 0.0
        %v903 = vmax.f32 %v879, 0.0
        %v904 = vmax.f32 %v884, 0.0
        %v905 = vmax.f32 %v887, 0.0
        %v906 = vpack.c.bf16 %v891, %v890
        %v907 = vpack.c.bf16 %v893, %v892
        %v908 = vpack.c.bf16 %v895, %v894
        %v909 = vpack.c.bf16 %v897, %v896
        %v910 = vpack.c.bf16 %v899, %v898
        %v911 = vpack.c.bf16 %v901, %v900
        %v912 = vpack.c.bf16 %v903, %v902
        %v913 = vpack.c.bf16 %v905, %v904
        %v914 = vld [vmem:[%s5] sm:$0xf]
        %v915 = vld [vmem:[%s5 + $0x4] sm:$0xf]
        %v916 = vld [vmem:[%s5 + $0x8] sm:$0xf]
        %v917 = vld [vmem:[%s5 + $0xc] sm:$0xf]
        %v918 = vld [vmem:[%s5 + $0x10] sm:$0xf]
        %v919 = vld [vmem:[%s5 + $0x14] sm:$0xf]
        %v920 = vld [vmem:[%s5 + $0x18] sm:$0xf]
        %v921 = vld [vmem:[%s5 + $0x1c] sm:$0xf]
        %v922 = vld [vmem:[%s5 + $0x20] sm:$0xf]
        %v923 = vld [vmem:[%s5 + $0x24] sm:$0xf]
        %v924 = vld [vmem:[%s5 + $0x28] sm:$0xf]
        %v925 = vld [vmem:[%s5 + $0x2c] sm:$0xf]
        %v926 = vld [vmem:[%s5 + $0x30] sm:$0xf]
        %v927 = vld [vmem:[%s5 + $0x34] sm:$0xf]
        %v928 = vld [vmem:[%s5 + $0x38] sm:$0xf]
        %v929 = vld [vmem:[%s5 + $0x3c] sm:$0xf]
        %v930 = vld [vmem:[%s6] sm:$0x1]
        %v932 = vlaneseq
        %v933 = vshrl.u32 %v932, 7
        %v934 = vsub.s32 0, %v933
        %v935 = vrot.slane %v930, %v934
        %v953 = vunpack.c.l.b16 %v914
        %v954 = vunpack.c.l.b16 %v915
        %v955 = vunpack.c.l.b16 %v916
        %v956 = vunpack.c.l.b16 %v917
        %v957 = vunpack.c.l.b16 %v918
        %v958 = vunpack.c.l.b16 %v919
        %v959 = vunpack.c.l.b16 %v920
        %v960 = vunpack.c.l.b16 %v921
        %v961 = vunpack.c.l.b16 %v922
        %v962 = vunpack.c.l.b16 %v923
        %v963 = vunpack.c.l.b16 %v924
        %v964 = vunpack.c.l.b16 %v925
        %v965 = vunpack.c.l.b16 %v926
        %v966 = vunpack.c.l.b16 %v927
        %v967 = vunpack.c.l.b16 %v928
        %v968 = vunpack.c.l.b16 %v929
        %v969 = vpack.c.b16 %v954, %v953
        %v970 = vpack.c.b16 %v956, %v955
        %v971 = vpack.c.b16 %v958, %v957
        %v972 = vpack.c.b16 %v960, %v959
        %v973 = vpack.c.b16 %v962, %v961
        %v974 = vpack.c.b16 %v964, %v963
        %v975 = vpack.c.b16 %v966, %v965
        %v976 = vpack.c.b16 %v968, %v967
        %985 = vmatprep.subr.bf16.mxu0 0
        %986 = vmatpush1.bf16.msra.mxu0 %v969
        %987 = vmatprep.subr.bf16.mxu0 0
        %988 = vmatpush1.bf16.msra.mxu0 %v970
        %989 = vmatprep.subr.bf16.mxu0 0
        %990 = vmatpush1.bf16.msra.mxu0 %v971
        %991 = vmatprep.subr.bf16.mxu0 0
        %992 = vmatpush1.bf16.msra.mxu0 %v972
        %993 = vmatprep.subr.bf16.mxu0 0
        %994 = vmatpush1.bf16.msra.mxu0 %v973
        %995 = vmatprep.subr.bf16.mxu0 0
        %996 = vmatpush1.bf16.msra.mxu0 %v974
        %997 = vmatprep.subr.bf16.mxu0 0
        %998 = vmatpush1.bf16.msra.mxu0 %v975
        %999 = vmatprep.subr.bf16.mxu0 0
        %1000 = vmatpush1.bf16.msra.mxu0 %v976
        %1001 = vmatprep.subr.bf16.mxu0 0
        %1002 = vmatpush1.bf16.msra.mxu0 0
        %1003 = vmatprep.subr.bf16.mxu0 0
        %1004 = vmatpush1.bf16.msra.mxu0 0
        %1005 = vmatprep.subr.bf16.mxu0 0
        %1006 = vmatpush1.bf16.msra.mxu0 0
        %1007 = vmatprep.subr.bf16.mxu0 0
        %1008 = vmatpush1.bf16.msra.mxu0 0
        %1009 = vmatprep.subr.bf16.mxu0 0
        %1010 = vmatpush1.bf16.msra.mxu0 0
        %1011 = vmatprep.subr.bf16.mxu0 0
        %1012 = vmatpush1.bf16.msra.mxu0 0
        %1013 = vmatprep.subr.bf16.mxu0 0
        %1014 = vmatpush1.bf16.msra.mxu0 0
        %1015 = vmatprep.subr.bf16.mxu0 0
        %1016 = vmatpush1.bf16.msra.mxu0 0
        %1017 = vmatprep.mubr.bf16.mxu0 0
        %1018 = vmatmul.mubr.bf16.gmra.mrb[0].mxu0 %v906
        %v1019 = vpop.f32.mrb[0].mxu0
        %v1020 = vadd.f32 %v935, %v1019
        %v1021 = vpop.f32.mrb[0].mxu0
        %v1022 = vpop.f32.mrb[0].mxu0
        %v1023 = vadd.f32 %v935, %v1022
        %v1024 = vpop.f32.mrb[0].mxu0
        %1025 = vmatprep.mubr.bf16.mxu0 0
        %1026 = vmatmul.mubr.bf16.gmra.mrb[0].mxu0 %v907
        %v1027 = vpop.f32.mrb[0].mxu0
        %v1028 = vadd.f32 %v935, %v1027
        %v1029 = vpop.f32.mrb[0].mxu0
        %v1030 = vpop.f32.mrb[0].mxu0
        %v1031 = vadd.f32 %v935, %v1030
        %v1032 = vpop.f32.mrb[0].mxu0
        %1033 = vmatprep.mubr.bf16.mxu0 0
        %1034 = vmatmul.mubr.bf16.gmra.mrb[0].mxu0 %v908
        %v1035 = vpop.f32.mrb[0].mxu0
        %v1036 = vadd.f32 %v935, %v1035
        %v1037 = vpop.f32.mrb[0].mxu0
        %v1038 = vpop.f32.mrb[0].mxu0
        %v1039 = vadd.f32 %v935, %v1038
        %v1040 = vpop.f32.mrb[0].mxu0
        %1041 = vmatprep.mubr.bf16.mxu0 0
        %1042 = vmatmul.mubr.bf16.gmra.mrb[0].mxu0 %v909
        %v1043 = vpop.f32.mrb[0].mxu0
        %v1044 = vadd.f32 %v935, %v1043
        %v1045 = vpop.f32.mrb[0].mxu0
        %v1046 = vpop.f32.mrb[0].mxu0
        %v1047 = vadd.f32 %v935, %v1046
        %v1048 = vpop.f32.mrb[0].mxu0
        %1049 = vmatprep.mubr.bf16.mxu0 0
        %1050 = vmatmul.mubr.bf16.gmra.mrb[0].mxu0 %v910
        %v1051 = vpop.f32.mrb[0].mxu0
        %v1052 = vadd.f32 %v935, %v1051
        %v1053 = vpop.f32.mrb[0].mxu0
        %v1054 = vpop.f32.mrb[0].mxu0
        %v1055 = vadd.f32 %v935, %v1054
        %v1056 = vpop.f32.mrb[0].mxu0
        %1057 = vmatprep.mubr.bf16.mxu0 0
        %1058 = vmatmul.mubr.bf16.gmra.mrb[0].mxu0 %v911
        %v1059 = vpop.f32.mrb[0].mxu0
        %v1060 = vadd.f32 %v935, %v1059
        %v1061 = vpop.f32.mrb[0].mxu0
        %v1062 = vpop.f32.mrb[0].mxu0
        %v1063 = vadd.f32 %v935, %v1062
        %v1064 = vpop.f32.mrb[0].mxu0
        %1065 = vmatprep.mubr.bf16.mxu0 0
        %1066 = vmatmul.mubr.bf16.gmra.mrb[0].mxu0 %v912
        %v1067 = vpop.f32.mrb[0].mxu0
        %v1068 = vadd.f32 %v935, %v1067
        %v1069 = vpop.f32.mrb[0].mxu0
        %v1070 = vpop.f32.mrb[0].mxu0
        %v1071 = vadd.f32 %v935, %v1070
        %v1072 = vpop.f32.mrb[0].mxu0
        %1073 = vmatprep.mubr.bf16.mxu0 0
        %1074 = vmatmul.mubr.bf16.gmra.mrb[0].mxu0 %v913
        %v1075 = vpop.f32.mrb[0].mxu0
        %v1076 = vadd.f32 %v935, %v1075
        %v1077 = vpop.f32.mrb[0].mxu0
        %v1078 = vpop.f32.mrb[0].mxu0
        %v1079 = vadd.f32 %v935, %v1078
        %v1080 = vpop.f32.mrb[0].mxu0
        %1081 = vdwg.mxu0
        %v1082 = vmax.f32 %v1020, %v1036
        %v1083 = vmax.f32 %v1023, %v1039
        %v1084 = vmax.f32 %v1028, %v1044
        %v1085 = vmax.f32 %v1031, %v1047
        %v1086 = vmax.f32 %v1082, %v1052
        %v1087 = vmax.f32 %v1083, %v1055
        %v1088 = vmax.f32 %v1084, %v1060
        %v1089 = vmax.f32 %v1085, %v1063
        %v1090 = vmax.f32 %v1086, %v1068
        %v1091 = vmax.f32 %v1087, %v1071
        %v1092 = vmax.f32 %v1088, %v1076
        %v1093 = vmax.f32 %v1089, %v1079
        %v1094 = vmax.f32 %v1090, %v1091
        %v1095 = vmax.f32 %v1092, %v1093
        %v1096 = vmax.f32 %v1094, %v1095
        %v1097 = vrot.slane %v1096, 4
        %v1098 = vmax.f32 %v1096, %v1097
        %v1099 = vrot.slane %v1098, 2
        %v1100 = vmax.f32 %v1098, %v1099
        %v1101 = vrot.slane %v1100, 1
        %v1102 = vmax.f32 %v1100, %v1101
        %1103 = vst [vmem:[%s321] sm:$0x1] %v1102
        %s1104 = sand.u32 %s209, 1
        %s1105 = scalar_lea.sflag [#allocation3], %s1104
        %s1106 = sand.u32 %s209, 1
        %s1107 = scalar_lea.vmem [#allocation2], %s1106
        // Predicated region
        $region49: #{tpu_custom_call.1} parent=47 // pred_check
          %p1108 = pneg %p219
        $region50: #{tpu_custom_call.1} parent=47 // pred_check_branch
          %1110 = sbr.rel (%p1108) target = $region52
        $region51: #{tpu_custom_call.1} parent=47 // pred_region
          %s1111 = smul.u32 %s25, 2
          %s1112 = sadd.s32 %s1111, %s26
          %s1114 = ssub.s32 16, 16
          %1115 = vsyncadd %s1105, %s1114
          %s1116 = smul.addr %s1112, 16
          %s1117 = scalar_lea.hbm %s7, %s1116
          %s1119 = sshll.u32 %s1107, 4
          %s1120 = int_to_ptr.vmem [resolvable:$true] %s1119
          %1122 = dma.vmem_to_hbm [thread:$0]  %s1120, 16, %s1117, %s1105
        $region52: #{tpu_custom_call.1} parent=47 // pred_fallthru
          _
      $region48: #{tpu_custom_call.1} parent=5 // pred_fallthru
        _
      %p1123 = scmp.le.s32.totalorder 2, %s16
      // Predicated region
      $region53: #{tpu_custom_call.1} parent=5 // pred_check
        %p1124 = pneg %p1123
      $region54: #{tpu_custom_call.1} parent=5 // pred_check_branch
        %1126 = sbr.rel (%p1124) target = $region56
      $region55: #{tpu_custom_call.1} parent=5 // pred_region
        %s1127 = ssub.s32 %s16, 2
        // Predicated region
        $region57: #{tpu_custom_call.1} parent=55 // pred_check
          %p1128 = pneg %p225
        $region58: #{tpu_custom_call.1} parent=55 // pred_check_branch
          %1130 = sbr.rel (%p1128) target = $region60
        $region59: #{tpu_custom_call.1} parent=55 // pred_region
          %s1131 = sand.u32 %s210, 1
          %s1132 = scalar_lea.sflag [#allocation3], %s1131
          %s1133 = sand.u32 %s210, 1
          %s1134 = scalar_lea.vmem [#allocation2], %s1133
          %1135 = dma.done %s1132, 16
        $region60: #{tpu_custom_call.1} parent=55 // pred_fallthru
          _
      $region56: #{tpu_custom_call.1} parent=5 // pred_fallthru
        _
    $region6: #{tpu_custom_call.1} parent=1 // loop_footer
      %s20 = sadd.s32 1, %s16
    $region7: #{tpu_custom_call.1} parent=1 // loop_footer_branch
      %15 = sbr.rel target = $region3
    $region8: #{tpu_custom_call.1} parent=1 // loop_exit
      _
    %1136 = vsyncpa [#allocation3], 1
    %s1137 = scalar_lea.sflag [#allocation3], 1
    %1138 = vsyncpa %s1137, 1

</llo_original>
